<compile_context>
chip_gen: v6e
topology: v6e:2x2x1
jax: 0.10.0
libtpu: 0.0.40
codegen_flags: <defaults>
</compile_context>

<pallas_src>
import jax
import jax.numpy as jnp
from jax.experimental import pallas as pl
from jax.experimental.pallas import tpu as pltpu

EMBED_DIM = 768
NUM_PATCHES = 64            # (64 / 8) * (64 / 8)
PATCH = 8
IN_CH = 3
K_FLAT = IN_CH * PATCH * PATCH   # 192
BN_EPS = 1e-5


def _cdiv(a, b):
    return -(-a // b)


def stats_kernel(xp_ref, c_ref, sum_ref, gram_ref):
    """Accumulate column sum and Gram matrix of the centered patch matrix.

    Grid = (core_split, steps): axis 0 'parallel' (per-core partials, used by
    v7x megacore), axis 1 'arbitrary' (the actual reduction).
    """
    @pl.when(pl.program_id(1) == 0)
    def _init():
        sum_ref[...] = jnp.zeros_like(sum_ref)
        gram_ref[...] = jnp.zeros_like(gram_ref)

    tn = xp_ref.shape[0]
    rows = tn * NUM_PATCHES
    x = xp_ref[...].reshape(rows, K_FLAT)              # bf16 tile
    xc = x - c_ref[...]                                # centered (cancellation guard)

    # Column sum on the MXU (ones-vector matmul) -> no f32 temporary, no XLU
    # cross-sublane reduce; frees VALU/XLU slots and scales with larger tiles.
    ones = jnp.ones((1, rows), dtype=jnp.bfloat16)
    col_sum = jax.lax.dot_general(
        ones, xc, dimension_numbers=(((1,), (0,)), ((), ())),
        preferred_element_type=jnp.float32)            # (1, 192)
    sum_ref[...] += col_sum[None]

    # Gram matrix Xc^T Xc on the MXU (bf16 inputs, f32 accumulation).
    gram = jax.lax.dot_general(
        xc, xc, dimension_numbers=(((0,), (0,)), ((), ())),
        preferred_element_type=jnp.float32)            # (192, 192)
    gram_ref[...] += gram[None]


def apply_kernel(xp_ref, w_ref, scale_ref, shift_ref, pos_ref, o_ref):
    """out = relu((X @ W) * scale + shift) + pos  for one batch tile."""
    tn = xp_ref.shape[0]
    x = xp_ref[...].reshape(tn * NUM_PATCHES, K_FLAT)  # bf16 tile
    z = jnp.dot(x, w_ref[...], preferred_element_type=jnp.float32)
    y = jnp.maximum(z * scale_ref[...] + shift_ref[...], 0.0)
    y = y.reshape(tn, NUM_PATCHES, EMBED_DIM) + pos_ref[...]
    o_ref[...] = y.astype(o_ref.dtype)


def conv_patching_rgb2_forward(x, conv_w, conv_b, bn_gamma, bn_beta, pos,
                               out_dtype=jnp.float32):
    """x: (N, 3, 64, 64) f32 NCHW.  Returns (N, 64, 768) in `out_dtype`."""
    N = x.shape[0]
    assert x.shape == (N, IN_CH, 8 * PATCH, 8 * PATCH)
    rows = N * NUM_PATCHES

    # ---- glue: patch extraction & weight reshape (pure layout plumbing) ----
    # (N, ci, ph*8+kh, pw*8+kw) -> (N, ph, pw, ci, kh, kw) -> (N, 64, 192)
    xp = (x.reshape(N, IN_CH, 8, PATCH, 8, PATCH)
            .transpose(0, 2, 4, 1, 3, 5)
            .reshape(N, NUM_PATCHES, K_FLAT))
    # TODO(synk): if an HLO dump ever shows the transpose + bf16 cast not
    # fusing (an f32 xp materialized in HBM), fold extraction into pass 1.
    xp_bf = xp.astype(jnp.bfloat16)                 # MXU-native matmul input
    # conv_w: (768, 3, 8, 8) -> (192, 768), row order (ci, kh, kw)
    wm_bf = conv_w.reshape(EMBED_DIM, K_FLAT).T.astype(jnp.bfloat16)

    # ---- tiling: decoupled from N-divisibility via zero padding ------------
    #   * >= 4 grid steps whenever N allows (hide per-step DMA behind compute,
    #     feed both v7x cores / megacore sharding),
    #   * <= 32 images per step (pass-2 blocks ~14.5 MiB double-buffered ->
    #     fits the 32 MiB vmem limit requested below on v5e/v6e/v7x),
    #   * even number of tiles so pass 1 splits cleanly across two cores.
    num_tiles = min(N, max(4, _cdiv(N, 32)))
    if num_tiles > 1 and num_tiles % 2:
        num_tiles += 1
    tile_n = _cdiv(N, num_tiles)
    n_pad = num_tiles * tile_n
    n_split = 2 if num_tiles % 2 == 0 else 1
    steps = num_tiles // n_split
    pad_imgs = n_pad - N
    if pad_imgs:
        xp_bf = jnp.pad(xp_bf, ((0, pad_imgs), (0, 0), (0, 0)))

    # ---- approximate per-column mean for centering (cancellation guard) ----
    c32 = jnp.mean(xp[: min(N, 8)].reshape(-1, K_FLAT), axis=0, keepdims=True)
    c_bf = c32.astype(jnp.bfloat16)
    c32 = c_bf.astype(jnp.float32)          # exactly the value the kernel sees

    # ---- pass 1: BN statistics via centered column-sum + Gram --------------
    stats_cost = pl.CostEstimate(
        flops=2 * n_pad * NUM_PATCHES * K_FLAT * (K_FLAT + 1),
        transcendentals=0,
        bytes_accessed=(n_pad * NUM_PATCHES * K_FLAT * 2
                        + n_split * (K_FLAT * K_FLAT + K_FLAT) * 4))
    part_sum, part_gram = pl.pallas_call(
        stats_kernel,
        out_shape=(jax.ShapeDtypeStruct((n_split, 1, K_FLAT), jnp.float32),
                   jax.ShapeDtypeStruct((n_split, K_FLAT, K_FLAT),
                                        jnp.float32)),
        grid_spec=pl.GridSpec(
            grid=(n_split, steps),
            in_specs=[
                pl.BlockSpec((tile_n, NUM_PATCHES, K_FLAT),
                             lambda c, s: (c * steps + s, 0, 0)),
                pl.BlockSpec((1, K_FLAT), lambda c, s: (0, 0)),
            ],
            out_specs=(pl.BlockSpec((1, 1, K_FLAT), lambda c, s: (c, 0, 0)),
                       pl.BlockSpec((1, K_FLAT, K_FLAT),
                                    lambda c, s: (c, 0, 0))),
        ),
        compiler_params=pltpu.CompilerParams(
            dimension_semantics=("parallel", "arbitrary")),
        cost_estimate=stats_cost,
    )(xp_bf, c_bf)

    sum_xc = part_sum.sum(axis=0)                      # (1, 192)
    gram = part_gram.sum(axis=0)                       # (192, 192)
    # Zero-padded rows become exactly -c after centering (bf16-exact), so they
    # add -c to the sum and c^T c to the Gram.  Remove them analytically.
    pad_rows = pad_imgs * NUM_PATCHES
    if pad_rows:
        sum_xc = sum_xc + pad_rows * c32
        gram = gram - pad_rows * (c32.T @ c32)

    # ---- tiny per-channel math: fold BN into one (scale, shift) pair -------
    # z = X @ W is what pass 2 computes; y = z + conv_b.  Training-mode BN is
    # shift-invariant, so conv_b cancels exactly and never enters the kernel.
    _ = conv_b
    w32 = wm_bf.astype(jnp.float32)           # same rounding the MXU sees
    mean_zc = (sum_xc @ w32) / rows                                 # (1, 768)
    e_zc2 = jnp.sum(w32 * (gram @ w32), axis=0, keepdims=True) / rows
    var = jnp.maximum(e_zc2 - mean_zc * mean_zc, 0.0)   # biased, matches BN
    mean_z = mean_zc + c32 @ w32                                    # (1, 768)
    scale = bn_gamma[None, :] * jax.lax.rsqrt(var + BN_EPS)         # (1, 768)
    shift = bn_beta[None, :] - mean_z * scale                       # (1, 768)

    # ---- pass 2: pipelined matmul + fused BN / ReLU / positional add -------
    out_bytes = jnp.dtype(out_dtype).itemsize
    main_cost = pl.CostEstimate(
        flops=2 * n_pad * NUM_PATCHES * K_FLAT * EMBED_DIM,
        transcendentals=0,
        bytes_accessed=(n_pad * NUM_PATCHES * K_FLAT * 2
                        + K_FLAT * EMBED_DIM * 2
                        + (2 + NUM_PATCHES) * EMBED_DIM * 4
                        + n_pad * NUM_PATCHES * EMBED_DIM * out_bytes))
    out = pl.pallas_call(
        apply_kernel,
        out_shape=jax.ShapeDtypeStruct((n_pad, NUM_PATCHES, EMBED_DIM),
                                       out_dtype),
        grid_spec=pl.GridSpec(
            grid=(num_tiles,),
            in_specs=[
                pl.BlockSpec((tile_n, NUM_PATCHES, K_FLAT),
                             lambda i: (i, 0, 0)),
                pl.BlockSpec((K_FLAT, EMBED_DIM), lambda i: (0, 0)),
                pl.BlockSpec((1, EMBED_DIM), lambda i: (0, 0)),
                pl.BlockSpec((1, EMBED_DIM), lambda i: (0, 0)),
                pl.BlockSpec((1, NUM_PATCHES, EMBED_DIM),
                             lambda i: (0, 0, 0)),
            ],
            out_specs=pl.BlockSpec((tile_n, NUM_PATCHES, EMBED_DIM),
                                   lambda i: (i, 0, 0)),
        ),
        compiler_params=pltpu.CompilerParams(
            dimension_semantics=("parallel",),
            vmem_limit_bytes=32 * 1024 * 1024),
        cost_estimate=main_cost,
    )(xp_bf, wm_bf, scale, shift, pos.astype(jnp.float32))

    return out[:N] if pad_imgs else out


def reference_forward(x, conv_w, conv_b, bn_gamma, bn_beta, pos):
    """Pure-JAX f32 reference mirroring the PyTorch forward (training-mode BN)."""
    N = x.shape[0]
    y = jax.lax.conv_general_dilated(
        x, conv_w, window_strides=(PATCH, PATCH), padding="VALID",
        dimension_numbers=("NCHW", "OIHW", "NCHW"),
    )
    y = y + conv_b[None, :, None, None]
    mean = jnp.mean(y, axis=(0, 2, 3), keepdims=True)
    var = jnp.mean((y - mean) ** 2, axis=(0, 2, 3), keepdims=True)
    y = (y - mean) * jax.lax.rsqrt(var + BN_EPS)
    y = y * bn_gamma[None, :, None, None] + bn_beta[None, :, None, None]
    y = jnp.maximum(y, 0.0)
    out = y.reshape(N, EMBED_DIM, NUM_PATCHES).transpose(0, 2, 1) + pos
    return out


if __name__ == "__main__":
    key = jax.random.PRNGKey(0)
    k_x, k_w, k_b, k_pos = jax.random.split(key, 4)

    N = 2
    # input implied by the module: 3-channel 64x64 image -> 8x8 = 64 patches
    x = jax.random.normal(k_x, (N, IN_CH, 64, 64), dtype=jnp.float32)

    # deterministic parameter init (shapes per nn.Conv2d / nn.BatchNorm2d / Parameter)
    conv_w = 0.05 * jax.random.normal(
        k_w, (EMBED_DIM, IN_CH, PATCH, PATCH), dtype=jnp.float32)
    conv_b = 0.01 * jax.random.normal(k_b, (EMBED_DIM,), dtype=jnp.float32)
    bn_gamma = jnp.ones((EMBED_DIM,), dtype=jnp.float32)   # PyTorch BN init
    bn_beta = jnp.zeros((EMBED_DIM,), dtype=jnp.float32)   # PyTorch BN init
    pos = jax.random.normal(k_pos, (1, NUM_PATCHES, EMBED_DIM),
                            dtype=jnp.float32)

    fwd = jax.jit(conv_patching_rgb2_forward)
    out = fwd(x, conv_w, conv_b, bn_gamma, bn_beta, pos)
    out = jax.block_until_ready(out)

    ref = reference_forward(x, conv_w, conv_b, bn_gamma, bn_beta, pos)
    ref = jax.block_until_ready(ref)

    assert out.shape == (N, NUM_PATCHES, EMBED_DIM)
    # Tolerance accounts for bf16 MXU matmul inputs (f32 accumulation);
    # observed max abs error is well below 1e-2.
    assert jnp.allclose(out, ref, rtol=2e-2, atol=2e-2), (
        "mismatch vs reference: max abs err "
        f"{float(jnp.max(jnp.abs(out - ref)))}"
    )
    print("KERNEL_OK")
</pallas_src>

<mosaic_0001>
module attributes {stable_mosaic.version = 11 : i64} {
  func.func @stats_kernel(%arg0: i32, %arg1: i32, %arg2: memref<1x64x192xbf16, #tpu.memory_space<vmem>>, %arg3: memref<1x192xbf16, #tpu.memory_space<vmem>>, %arg4: memref<1x1x192xf32, #tpu.memory_space<vmem>>, %arg5: memref<1x192x192xf32, #tpu.memory_space<vmem>>) attributes {dimension_semantics = [#tpu.dimension_semantics<parallel>, #tpu.dimension_semantics<arbitrary>], iteration_bounds = array<i64: 2, 1>, scalar_prefetch = 0 : i64, scratch_operands = 0 : i64, tpu.core_type = #tpu.core_type<tc>, window_params = [{transform_indices = @transform_0, window_bounds = array<i64: 1, 64, 192>}, {pipeline_mode = #tpu.pipeline_mode<synchronous>, transform_indices = @transform_1, window_bounds = array<i64: 1, 192>}, {transform_indices = @transform_2, window_bounds = array<i64: 1, 1, 192>}, {transform_indices = @transform_3, window_bounds = array<i64: 1, 192, 192>}]} {
    %c0_i32 = arith.constant 0 : i32
    %0 = arith.cmpi eq, %arg1, %c0_i32 : i32
    %1 = arith.extui %0 : i1 to i32
    %c0_i32_0 = arith.constant 0 : i32
    %2 = arith.cmpi ne, %1, %c0_i32_0 : i32
    scf.if %2 {
      %cst_19 = arith.constant 0.000000e+00 : f32
      %19 = vector.broadcast %cst_19 : f32 to vector<1x1x192xf32>
      %c0_20 = arith.constant 0 : index
      %c0_21 = arith.constant 0 : index
      %c0_22 = arith.constant 0 : index
      %20 = vector.load %arg4[%c0_20, %c0_21, %c0_22] : memref<1x1x192xf32, #tpu.memory_space<vmem>>, vector<1x1x192xf32>
      tpu.vector_store %arg4[%c0_20, %c0_21, %c0_22], %19 {strides = array<i32>} : memref<1x1x192xf32, #tpu.memory_space<vmem>>, vector<1x1x192xf32>,
      %cst_23 = arith.constant 0.000000e+00 : f32
      %21 = vector.broadcast %cst_23 : f32 to vector<1x192x192xf32>
      %c0_24 = arith.constant 0 : index
      %c0_25 = arith.constant 0 : index
      %c0_26 = arith.constant 0 : index
      %22 = vector.load %arg5[%c0_24, %c0_25, %c0_26] : memref<1x192x192xf32, #tpu.memory_space<vmem>>, vector<1x192x192xf32>
      tpu.vector_store %arg5[%c0_24, %c0_25, %c0_26], %21 {strides = array<i32>} : memref<1x192x192xf32, #tpu.memory_space<vmem>>, vector<1x192x192xf32>,
    } else {
    }
    %c0 = arith.constant 0 : index
    %c0_1 = arith.constant 0 : index
    %c0_2 = arith.constant 0 : index
    %3 = vector.load %arg2[%c0, %c0_1, %c0_2] : memref<1x64x192xbf16, #tpu.memory_space<vmem>>, vector<1x64x192xbf16>
    %4 = vector.shape_cast %3 : vector<1x64x192xbf16> to vector<64x192xbf16>
    %c0_3 = arith.constant 0 : index
    %c0_4 = arith.constant 0 : index
    %5 = vector.load %arg3[%c0_3, %c0_4] : memref<1x192xbf16, #tpu.memory_space<vmem>>, vector<1x192xbf16>
    %6 = vector.broadcast %5 : vector<1x192xbf16> to vector<64x192xbf16>
    %7 = arith.subf %4, %6 : vector<64x192xbf16>
    %cst = arith.constant 1.000000e+00 : bf16
    %8 = vector.broadcast %cst : bf16 to vector<1x64xbf16>
    %cst_5 = arith.constant dense<0.000000e+00> : vector<1x192xf32>
    %9 = tpu.matmul %8, %7, %cst_5 {dimension_numbers = #tpu.dot_dimension_numbers<[1], [0], [0], [1], [0, 0, 1, 1], [], []>} : vector<1x64xbf16>, vector<64x192xbf16>, vector<1x192xf32> -> vector<1x192xf32>
    %c0_6 = arith.constant 0 : index
    %c0_7 = arith.constant 0 : index
    %c0_8 = arith.constant 0 : index
    %10 = vector.load %arg4[%c0_6, %c0_7, %c0_8] : memref<1x1x192xf32, #tpu.memory_space<vmem>>, vector<1x1x192xf32>
    %11 = vector.shape_cast %9 : vector<1x192xf32> to vector<1x1x192xf32>
    %12 = arith.addf %10, %11 : vector<1x1x192xf32>
    %c0_9 = arith.constant 0 : index
    %c0_10 = arith.constant 0 : index
    %c0_11 = arith.constant 0 : index
    %13 = vector.load %arg4[%c0_9, %c0_10, %c0_11] : memref<1x1x192xf32, #tpu.memory_space<vmem>>, vector<1x1x192xf32>
    tpu.vector_store %arg4[%c0_9, %c0_10, %c0_11], %12 {strides = array<i32>} : memref<1x1x192xf32, #tpu.memory_space<vmem>>, vector<1x1x192xf32>,
    %cst_12 = arith.constant dense<0.000000e+00> : vector<192x192xf32>
    %14 = tpu.matmul %7, %7, %cst_12 {dimension_numbers = #tpu.dot_dimension_numbers<[0], [0], [1], [1], [0, 1, 1, 1], [], []>} : vector<64x192xbf16>, vector<64x192xbf16>, vector<192x192xf32> -> vector<192x192xf32>
    %c0_13 = arith.constant 0 : index
    %c0_14 = arith.constant 0 : index
    %c0_15 = arith.constant 0 : index
    %15 = vector.load %arg5[%c0_13, %c0_14, %c0_15] : memref<1x192x192xf32, #tpu.memory_space<vmem>>, vector<1x192x192xf32>
    %16 = vector.shape_cast %14 : vector<192x192xf32> to vector<1x192x192xf32>
    %17 = arith.addf %15, %16 : vector<1x192x192xf32>
    %c0_16 = arith.constant 0 : index
    %c0_17 = arith.constant 0 : index
    %c0_18 = arith.constant 0 : index
    %18 = vector.load %arg5[%c0_16, %c0_17, %c0_18] : memref<1x192x192xf32, #tpu.memory_space<vmem>>, vector<1x192x192xf32>
    tpu.vector_store %arg5[%c0_16, %c0_17, %c0_18], %17 {strides = array<i32>} : memref<1x192x192xf32, #tpu.memory_space<vmem>>, vector<1x192x192xf32>,
    return
  }
  func.func @transform_0(%arg0: i32, %arg1: i32) -> (i32, i32, i32) {
    %c1_i32 = arith.constant 1 : i32
    %0 = arith.muli %arg0, %c1_i32 : i32
    %1 = arith.addi %0, %arg1 : i32
    %c0_i32 = arith.constant 0 : i32
    %c0_i32_0 = arith.constant 0 : i32
    %c0_i32_1 = arith.constant 0 : i32
    return %1, %c0_i32, %c0_i32_0 : i32, i32, i32
  }
  func.func @transform_1(%arg0: i32, %arg1: i32) -> (i32, i32) {
    %c0_i32 = arith.constant 0 : i32
    %c0_i32_0 = arith.constant 0 : i32
    %c0_i32_1 = arith.constant 0 : i32
    return %c0_i32, %c0_i32_0 : i32, i32
  }
  func.func @transform_2(%arg0: i32, %arg1: i32) -> (i32, i32, i32) {
    %c0_i32 = arith.constant 0 : i32
    %c0_i32_0 = arith.constant 0 : i32
    %c0_i32_1 = arith.constant 0 : i32
    return %arg0, %c0_i32, %c0_i32_0 : i32, i32, i32
  }
  func.func @transform_3(%arg0: i32, %arg1: i32) -> (i32, i32, i32) {
    %c0_i32 = arith.constant 0 : i32
    %c0_i32_0 = arith.constant 0 : i32
    %c0_i32_1 = arith.constant 0 : i32
    return %arg0, %c0_i32, %c0_i32_0 : i32, i32, i32
  }
}

module attributes {stable_mosaic.version = 11 : i64} {
  func.func @apply_kernel(%arg0: i32, %arg1: memref<1x64x192xbf16, #tpu.memory_space<vmem>>, %arg2: memref<192x768xbf16, #tpu.memory_space<vmem>>, %arg3: memref<1x768xf32, #tpu.memory_space<vmem>>, %arg4: memref<1x768xf32, #tpu.memory_space<vmem>>, %arg5: memref<1x64x768xf32, #tpu.memory_space<vmem>>, %arg6: memref<1x64x768xf32, #tpu.memory_space<vmem>>) attributes {dimension_semantics = [#tpu.dimension_semantics<parallel>], iteration_bounds = array<i64: 2>, scalar_prefetch = 0 : i64, scratch_operands = 0 : i64, tpu.core_type = #tpu.core_type<tc>, window_params = [{transform_indices = @transform_0, window_bounds = array<i64: 1, 64, 192>}, {pipeline_mode = #tpu.pipeline_mode<synchronous>, transform_indices = @transform_1, window_bounds = array<i64: 192, 768>}, {pipeline_mode = #tpu.pipeline_mode<synchronous>, transform_indices = @transform_2, window_bounds = array<i64: 1, 768>}, {pipeline_mode = #tpu.pipeline_mode<synchronous>, transform_indices = @transform_3, window_bounds = array<i64: 1, 768>}, {pipeline_mode = #tpu.pipeline_mode<synchronous>, transform_indices = @transform_4, window_bounds = array<i64: 1, 64, 768>}, {transform_indices = @transform_5, window_bounds = array<i64: 1, 64, 768>}]} {
    %c0 = arith.constant 0 : index
    %c0_0 = arith.constant 0 : index
    %c0_1 = arith.constant 0 : index
    %0 = vector.load %arg1[%c0, %c0_0, %c0_1] : memref<1x64x192xbf16, #tpu.memory_space<vmem>>, vector<1x64x192xbf16>
    %1 = vector.shape_cast %0 : vector<1x64x192xbf16> to vector<64x192xbf16>
    %c0_2 = arith.constant 0 : index
    %c0_3 = arith.constant 0 : index
    %2 = vector.load %arg2[%c0_2, %c0_3] : memref<192x768xbf16, #tpu.memory_space<vmem>>, vector<192x768xbf16>
    %cst = arith.constant dense<0.000000e+00> : vector<64x768xf32>
    %3 = tpu.matmul %1, %2, %cst {dimension_numbers = #tpu.dot_dimension_numbers<[1], [0], [0], [1], [0, 0, 1, 1], [], []>} : vector<64x192xbf16>, vector<192x768xbf16>, vector<64x768xf32> -> vector<64x768xf32>
    %c0_4 = arith.constant 0 : index
    %c0_5 = arith.constant 0 : index
    %4 = vector.load %arg3[%c0_4, %c0_5] : memref<1x768xf32, #tpu.memory_space<vmem>>, vector<1x768xf32>
    %5 = vector.broadcast %4 : vector<1x768xf32> to vector<64x768xf32>
    %6 = arith.mulf %3, %5 : vector<64x768xf32>
    %c0_6 = arith.constant 0 : index
    %c0_7 = arith.constant 0 : index
    %7 = vector.load %arg4[%c0_6, %c0_7] : memref<1x768xf32, #tpu.memory_space<vmem>>, vector<1x768xf32>
    %8 = vector.broadcast %7 : vector<1x768xf32> to vector<64x768xf32>
    %9 = arith.addf %6, %8 : vector<64x768xf32>
    %cst_8 = arith.constant 0.000000e+00 : f32
    %10 = vector.broadcast %cst_8 : f32 to vector<64x768xf32>
    %11 = arith.maximumf %9, %10 : vector<64x768xf32>
    %12 = vector.shape_cast %11 : vector<64x768xf32> to vector<1x64x768xf32>
    %c0_9 = arith.constant 0 : index
    %c0_10 = arith.constant 0 : index
    %c0_11 = arith.constant 0 : index
    %13 = vector.load %arg5[%c0_9, %c0_10, %c0_11] : memref<1x64x768xf32, #tpu.memory_space<vmem>>, vector<1x64x768xf32>
    %14 = arith.addf %12, %13 : vector<1x64x768xf32>
    %c0_12 = arith.constant 0 : index
    %c0_13 = arith.constant 0 : index
    %c0_14 = arith.constant 0 : index
    %15 = vector.load %arg6[%c0_12, %c0_13, %c0_14] : memref<1x64x768xf32, #tpu.memory_space<vmem>>, vector<1x64x768xf32>
    tpu.vector_store %arg6[%c0_12, %c0_13, %c0_14], %14 {strides = array<i32>} : memref<1x64x768xf32, #tpu.memory_space<vmem>>, vector<1x64x768xf32>,
    return
  }
  func.func @transform_0(%arg0: i32) -> (i32, i32, i32) {
    %c0_i32 = arith.constant 0 : i32
    %c0_i32_0 = arith.constant 0 : i32
    %c0_i32_1 = arith.constant 0 : i32
    return %arg0, %c0_i32, %c0_i32_0 : i32, i32, i32
  }
  func.func @transform_1(%arg0: i32) -> (i32, i32) {
    %c0_i32 = arith.constant 0 : i32
    %c0_i32_0 = arith.constant 0 : i32
    %c0_i32_1 = arith.constant 0 : i32
    return %c0_i32, %c0_i32_0 : i32, i32
  }
  func.func @transform_2(%arg0: i32) -> (i32, i32) {
    %c0_i32 = arith.constant 0 : i32
    %c0_i32_0 = arith.constant 0 : i32
    %c0_i32_1 = arith.constant 0 : i32
    return %c0_i32, %c0_i32_0 : i32, i32
  }
  func.func @transform_3(%arg0: i32) -> (i32, i32) {
    %c0_i32 = arith.constant 0 : i32
    %c0_i32_0 = arith.constant 0 : i32
    %c0_i32_1 = arith.constant 0 : i32
    return %c0_i32, %c0_i32_0 : i32, i32
  }
  func.func @transform_4(%arg0: i32) -> (i32, i32, i32) {
    %c0_i32 = arith.constant 0 : i32
    %c0_i32_0 = arith.constant 0 : i32
    %c0_i32_1 = arith.constant 0 : i32
    %c0_i32_2 = arith.constant 0 : i32
    return %c0_i32, %c0_i32_0, %c0_i32_1 : i32, i32, i32
  }
  func.func @transform_5(%arg0: i32) -> (i32, i32, i32) {
    %c0_i32 = arith.constant 0 : i32
    %c0_i32_0 = arith.constant 0 : i32
    %c0_i32_1 = arith.constant 0 : i32
    return %arg0, %c0_i32, %c0_i32_0 : i32, i32, i32
  }
}

</mosaic_0001>

<llo_original>
// kernel: conv_patching_rgb2_forward.2
$region0: #{conv_patching_rgb2_forward.2}
  #allocation0 [shape = 'u32[]', space=smem, size = 0x4, offset = 0x4, fixed_abs, tag = 'smem constant byte address 0x4 - core index']
  #allocation1 [shape = 'u32[144,128]{1,0:T(1,128)}', space=vmem, size = 0x12000, scoped, tag = 'internal scratch']
  %s0 = inlined_call_operand.vmem [shape: bf16[2,64,192], index: 0, kind: input, shape index: {}]
  %s1 = inlined_call_operand.vmem [shape: bf16[1,192], index: 1, kind: input, shape index: {}]
  %s2 = inlined_call_operand.vmem [shape: f32[2,1,192], index: 2, kind: output, shape index: {0}]
  %s3 = inlined_call_operand.vmem [shape: f32[2,192,192], index: 3, kind: output, shape index: {1}]
  %4 = xla_tuple %s2, %s3
  %s5 = sld [smem:[#allocation0]]
  $region53: #{conv_patching_rgb2_forward.2} parent=0
    _
  %s7 = ssub.s32 1, %s5
  %s8 = scalar_select 0, %s7, %s5
  loop: start=0, step=1, limit=4
  $region2: #{conv_patching_rgb2_forward.2} parent=0 // loop_pre_header
    _
  $region3: #{conv_patching_rgb2_forward.2} parent=0 // loop_header
    %s10 = sphi 0, %s14
    %p11 = scmp.ge.s32.totalorder %s10, 4
    %s17 = sphi 0, %s29
    %s18 = sphi 0, %s25
    %s19 = sphi 0, %s17
    %s20 = sphi 0, %s18
    %s21 = sphi 0, %s19
    %s22 = sphi 0, %s20
    %s34 = sphi 0, %s36
    %s37 = sphi 0, %s34
    %s38 = sphi 0, %s37
    %s54 = sphi 0, %s38
    %s58 = sphi 0, %s58
    %s60 = sphi 0, %s58
    %s61 = sphi 0, %s60
    %s75 = sphi 0, %s61
    %s81 = sphi 0, %s83
    %s84 = sphi 0, %s81
    %s85 = sphi 0, %s84
    %s101 = sphi 0, %s85
    %s107 = sphi 0, %s109
    %s110 = sphi 0, %s107
    %s111 = sphi 0, %s110
    %s127 = sphi 0, %s111
  $region4: #{conv_patching_rgb2_forward.2} parent=0 // loop_header_branch
    %13 = sbr.rel (%p11) target = $region8
  $region5: #{conv_patching_rgb2_forward.2} parent=0 // loop_body
    %s15 = ssub.s32 %s10, 1
    %s16 = ssub.s32 %s10, 2
    %s23 = sadd.s32 1, %s18
    %p24 = scmp.ge.s32.totalorder %s23, 1
    %s25 = scalar_select %p24, 0, %s23
    %s26 = sadd.s32 1, %s17
    %s27 = scalar_select %p24, %s26, %s17
    %p28 = scmp.ge.s32.totalorder %s27, 2
    %s29 = scalar_select %p28, 0, %s27
    %s30 = sadd.s32 %s17, %s18
    %s31 = sadd.s32 %s29, %s25
    %s32 = ssub.s32 %s30, %s31
    %p33 = scmp.eq.s32.totalorder %s32, 0
    %s35 = sadd.s32 %s34, 1
    %s36 = scalar_select %p33, %s34, %s35
    %p39 = pneg %p33
    %p40 = scmp.eq.s32.totalorder %s10, 1
    %p41 = por %p39, %p40
    %p42 = scmp.ne.s32.totalorder %s34, %s37
    %p43 = scmp.eq.s32.totalorder %s10, 0
    %p44 = por %p42, %p43
    %p45 = scmp.ne.s32.totalorder %s34, %s37
    %p46 = scmp.eq.s32.totalorder %s15, 1
    %p47 = por %p45, %p46
    %p48 = scmp.ne.s32.totalorder %s37, %s38
    %p49 = scmp.eq.s32.totalorder %s15, 0
    %p50 = por %p48, %p49
    %p51 = scmp.ne.s32.totalorder %s37, %s38
    %p52 = scmp.eq.s32.totalorder %s16, 1
    %p53 = por %p51, %p52
    %p55 = scmp.ne.s32.totalorder %s38, %s54
    %p56 = scmp.eq.s32.totalorder %s16, 0
    %p57 = por %p55, %p56
    %s59 = sadd.s32 %s58, 1
    %p62 = scmp.eq.s32.totalorder %s10, 1
    %p63 = scmp.ne.s32.totalorder %s58, %s60
    %p64 = scmp.eq.s32.totalorder %s10, 0
    %p65 = por %p63, %p64
    %p66 = scmp.ne.s32.totalorder %s58, %s60
    %p67 = scmp.eq.s32.totalorder %s15, 1
    %p68 = por %p66, %p67
    %p69 = scmp.ne.s32.totalorder %s60, %s61
    %p70 = scmp.eq.s32.totalorder %s15, 0
    %p71 = por %p69, %p70
    %p72 = scmp.ne.s32.totalorder %s60, %s61
    %p73 = scmp.eq.s32.totalorder %s16, 1
    %p74 = por %p72, %p73
    %p76 = scmp.ne.s32.totalorder %s61, %s75
    %p77 = scmp.eq.s32.totalorder %s16, 0
    %p78 = por %p76, %p77
    %s79 = ssub.s32 %s17, %s29
    %p80 = scmp.eq.s32.totalorder %s79, 0
    %s82 = sadd.s32 %s81, 1
    %s83 = scalar_select %p80, %s81, %s82
    %p86 = pneg %p80
    %p87 = scmp.eq.s32.totalorder %s10, 1
    %p88 = por %p86, %p87
    %p89 = scmp.ne.s32.totalorder %s81, %s84
    %p90 = scmp.eq.s32.totalorder %s10, 0
    %p91 = por %p89, %p90
    %p92 = scmp.ne.s32.totalorder %s81, %s84
    %p93 = scmp.eq.s32.totalorder %s15, 1
    %p94 = por %p92, %p93
    %p95 = scmp.ne.s32.totalorder %s84, %s85
    %p96 = scmp.eq.s32.totalorder %s15, 0
    %p97 = por %p95, %p96
    %p98 = scmp.ne.s32.totalorder %s84, %s85
    %p99 = scmp.eq.s32.totalorder %s16, 1
    %p100 = por %p98, %p99
    %p102 = scmp.ne.s32.totalorder %s85, %s101
    %p103 = scmp.eq.s32.totalorder %s16, 0
    %p104 = por %p102, %p103
    %s105 = ssub.s32 %s17, %s29
    %p106 = scmp.eq.s32.totalorder %s105, 0
    %s108 = sadd.s32 %s107, 1
    %s109 = scalar_select %p106, %s107, %s108
    %p112 = pneg %p106
    %p113 = scmp.eq.s32.totalorder %s10, 1
    %p114 = por %p112, %p113
    %p115 = scmp.ne.s32.totalorder %s107, %s110
    %p116 = scmp.eq.s32.totalorder %s10, 0
    %p117 = por %p115, %p116
    %p118 = scmp.ne.s32.totalorder %s107, %s110
    %p119 = scmp.eq.s32.totalorder %s15, 1
    %p120 = por %p118, %p119
    %p121 = scmp.ne.s32.totalorder %s110, %s111
    %p122 = scmp.eq.s32.totalorder %s15, 0
    %p123 = por %p121, %p122
    %p124 = scmp.ne.s32.totalorder %s110, %s111
    %p125 = scmp.eq.s32.totalorder %s16, 1
    %p126 = por %p124, %p125
    %p128 = scmp.ne.s32.totalorder %s111, %s127
    %p129 = scmp.eq.s32.totalorder %s16, 0
    %p130 = por %p128, %p129
    %p131 = scmp.le.s32.totalorder 1, %s10
    %p132 = scmp.lt.s32.totalorder %s10, 3
    %p133 = pnand %p131, %p132
    %p134 = pneg %p133
    // Predicated region
    $region9: #{conv_patching_rgb2_forward.2} parent=5 // pred_check
      _
    $region10: #{conv_patching_rgb2_forward.2} parent=5 // pred_check_branch
      %136 = sbr.rel (%p133) target = $region12
    $region11: #{conv_patching_rgb2_forward.2} parent=5 // pred_region
      %s137 = ssub.s32 %s10, 1
      // Predicated region
      $region13: #{conv_patching_rgb2_forward.2} parent=11 // pred_check
        %p138 = pneg %p71
      $region14: #{conv_patching_rgb2_forward.2} parent=11 // pred_check_branch
        %140 = sbr.rel (%p138) target = $region16
      $region15: #{conv_patching_rgb2_forward.2} parent=11 // pred_region
        _
      $region16: #{conv_patching_rgb2_forward.2} parent=11 // pred_fallthru
        _
    $region12: #{conv_patching_rgb2_forward.2} parent=5 // pred_fallthru
      _
    %p141 = scmp.lt.s32.totalorder %s10, 2
    // Predicated region
    $region17: #{conv_patching_rgb2_forward.2} parent=5 // pred_check
      %p142 = pneg %p141
    $region18: #{conv_patching_rgb2_forward.2} parent=5 // pred_check_branch
      %144 = sbr.rel (%p142) target = $region20
    $region19: #{conv_patching_rgb2_forward.2} parent=5 // pred_region
      // Predicated region
      $region21: #{conv_patching_rgb2_forward.2} parent=19 // pred_check
        %p145 = pneg %p44
      $region22: #{conv_patching_rgb2_forward.2} parent=19 // pred_check_branch
        %147 = sbr.rel (%p145) target = $region24
      $region23: #{conv_patching_rgb2_forward.2} parent=19 // pred_region
        %s148 = sadd.s32 %s17, %s18
        %p149 = scmp.lt.s32.totalorder %s148, 1
        %s150 = scalar_select %p149, %s148, 1
        %s151 = smul.addr %s150, 16
        %s152 = smul.addr %s151, 4
        %s153 = scalar_lea.vmem %s0, %s152
        %s154 = sadd.s32 %s17, %s18
      $region24: #{conv_patching_rgb2_forward.2} parent=19 // pred_fallthru
        _
    $region20: #{conv_patching_rgb2_forward.2} parent=5 // pred_fallthru
      _
    %p155 = scmp.le.s32.totalorder 1, %s10
    %p156 = scmp.lt.s32.totalorder %s10, 3
    %p157 = pnand %p155, %p156
    %p158 = pneg %p157
    // Predicated region
    $region25: #{conv_patching_rgb2_forward.2} parent=5 // pred_check
      _
    $region26: #{conv_patching_rgb2_forward.2} parent=5 // pred_check_branch
      %160 = sbr.rel (%p157) target = $region28
    $region27: #{conv_patching_rgb2_forward.2} parent=5 // pred_region
      %s161 = ssub.s32 %s10, 1
      %s162 = sadd.s32 %s19, %s20
      %p163 = scmp.lt.s32.totalorder %s162, 1
      %s164 = scalar_select %p163, %s162, 1
      %s165 = smul.addr %s164, 16
      %s166 = smul.addr %s165, 4
      %s167 = scalar_lea.vmem %s0, %s166
      %p168 = pneg %p50
      %p169 = pneg %p47
      %p170 = pneg %p71
      %p171 = pneg %p68
      %p172 = pneg %p97
      %p173 = pneg %p94
      %p174 = scmp.lt.s32.totalorder %s19, 1
      %s175 = scalar_select %p174, %s19, 1
      %s176 = smul.addr %s175, 2
      %s177 = scalar_lea.vmem %s2, %s176
      %p178 = pneg %p123
      %p179 = pneg %p120
      %p180 = scmp.lt.s32.totalorder %s19, 1
      %s181 = scalar_select %p180, %s19, 1
      %s182 = smul.addr %s181, 48
      %s183 = smul.addr %s182, 8
      %s184 = scalar_lea.vmem %s3, %s183
      %s185 = sadd.s32 %s19, %s20
      %p186 = scmp.lt.s32.totalorder %s185, 1
      %s187 = scalar_select %p186, %s185, 1
      %s188 = smul.addr %s187, 16
      %s189 = smul.addr %s188, 4
      %s190 = scalar_lea.vmem %s0, %s189
      %s191 = sadd.s32 %s19, %s20
      %p192 = scmp.lt.s32.totalorder %s19, 1
      %s193 = scalar_select %p192, %s19, 1
      %s194 = smul.addr %s193, 2
      %s195 = scalar_lea.vmem %s2, %s194
      %p196 = scmp.lt.s32.totalorder %s19, 1
      %s197 = scalar_select %p196, %s19, 1
      %s198 = smul.addr %s197, 48
      %s199 = smul.addr %s198, 8
      %s200 = scalar_lea.vmem %s3, %s199
      %p203 = scmp.eq.s32.totalorder %s20, 0
      // Predicated region
      $region29: #{conv_patching_rgb2_forward.2} parent=27 // pred_check
        %p204 = pneg %p203
      $region30: #{conv_patching_rgb2_forward.2} parent=27 // pred_check_branch
        %206 = sbr.rel (%p204) target = $region32
      $region31: #{conv_patching_rgb2_forward.2} parent=27 // pred_region
        %v207 = vlaneseq
        %vm208 = vcmp.ge.s32.totalorder %v207, 0
        %vm209 = vcmp.lt.s32.totalorder %v207, 192
        %vm210 = vmand %vm208, %vm209
        %211 = vst.msk [vmem:[%s195] sm:$0x3] %vm210, 0.0
        %212 = vst [vmem:[%s200] sm:$0xff] 0.0
        %vm213 = vcmask 523264
        %214 = vst.msk [vmem:[%s200 + $0x8] sm:$0xff] %vm213, 0.0
        %215 = vst [vmem:[%s200 + $0x10] sm:$0xff] 0.0
        %216 = vst.msk [vmem:[%s200 + $0x18] sm:$0xff] %vm213, 0.0
        %217 = vst [vmem:[%s200 + $0x20] sm:$0xff] 0.0
        %218 = vst.msk [vmem:[%s200 + $0x28] sm:$0xff] %vm213, 0.0
        %219 = vst [vmem:[%s200 + $0x30] sm:$0xff] 0.0
        %220 = vst.msk [vmem:[%s200 + $0x38] sm:$0xff] %vm213, 0.0
        %221 = vst [vmem:[%s200 + $0x40] sm:$0xff] 0.0
        %222 = vst.msk [vmem:[%s200 + $0x48] sm:$0xff] %vm213, 0.0
        %223 = vst [vmem:[%s200 + $0x50] sm:$0xff] 0.0
        %224 = vst.msk [vmem:[%s200 + $0x58] sm:$0xff] %vm213, 0.0
        %225 = vst [vmem:[%s200 + $0x60] sm:$0xff] 0.0
        %226 = vst.msk [vmem:[%s200 + $0x68] sm:$0xff] %vm213, 0.0
        %227 = vst [vmem:[%s200 + $0x70] sm:$0xff] 0.0
        %228 = vst.msk [vmem:[%s200 + $0x78] sm:$0xff] %vm213, 0.0
        %229 = vst [vmem:[%s200 + $0x80] sm:$0xff] 0.0
        %230 = vst.msk [vmem:[%s200 + $0x88] sm:$0xff] %vm213, 0.0
        %231 = vst [vmem:[%s200 + $0x90] sm:$0xff] 0.0
        %232 = vst.msk [vmem:[%s200 + $0x98] sm:$0xff] %vm213, 0.0
        %233 = vst [vmem:[%s200 + $0xa0] sm:$0xff] 0.0
        %234 = vst.msk [vmem:[%s200 + $0xa8] sm:$0xff] %vm213, 0.0
        %235 = vst [vmem:[%s200 + $0xb0] sm:$0xff] 0.0
        %236 = vst.msk [vmem:[%s200 + $0xb8] sm:$0xff] %vm213, 0.0
        %237 = vst [vmem:[%s200 + $0xc0] sm:$0xff] 0.0
        %238 = vst.msk [vmem:[%s200 + $0xc8] sm:$0xff] %vm213, 0.0
        %239 = vst [vmem:[%s200 + $0xd0] sm:$0xff] 0.0
        %240 = vst.msk [vmem:[%s200 + $0xd8] sm:$0xff] %vm213, 0.0
        %241 = vst [vmem:[%s200 + $0xe0] sm:$0xff] 0.0
        %242 = vst.msk [vmem:[%s200 + $0xe8] sm:$0xff] %vm213, 0.0
        %243 = vst [vmem:[%s200 + $0xf0] sm:$0xff] 0.0
        %244 = vst.msk [vmem:[%s200 + $0xf8] sm:$0xff] %vm213, 0.0
        %245 = vst [vmem:[%s200 + $0x100] sm:$0xff] 0.0
        %246 = vst.msk [vmem:[%s200 + $0x108] sm:$0xff] %vm213, 0.0
        %247 = vst [vmem:[%s200 + $0x110] sm:$0xff] 0.0
        %248 = vst.msk [vmem:[%s200 + $0x118] sm:$0xff] %vm213, 0.0
        %249 = vst [vmem:[%s200 + $0x120] sm:$0xff] 0.0
        %250 = vst.msk [vmem:[%s200 + $0x128] sm:$0xff] %vm213, 0.0
        %251 = vst [vmem:[%s200 + $0x130] sm:$0xff] 0.0
        %252 = vst.msk [vmem:[%s200 + $0x138] sm:$0xff] %vm213, 0.0
        %253 = vst [vmem:[%s200 + $0x140] sm:$0xff] 0.0
        %254 = vst.msk [vmem:[%s200 + $0x148] sm:$0xff] %vm213, 0.0
        %255 = vst [vmem:[%s200 + $0x150] sm:$0xff] 0.0
        %256 = vst.msk [vmem:[%s200 + $0x158] sm:$0xff] %vm213, 0.0
        %257 = vst [vmem:[%s200 + $0x160] sm:$0xff] 0.0
        %258 = vst.msk [vmem:[%s200 + $0x168] sm:$0xff] %vm213, 0.0
        %259 = vst [vmem:[%s200 + $0x170] sm:$0xff] 0.0
        %260 = vst.msk [vmem:[%s200 + $0x178] sm:$0xff] %vm213, 0.0
      $region32: #{conv_patching_rgb2_forward.2} parent=27 // pred_fallthru
        _
      %v261 = vld [vmem:[%s190] sm:$0xff]
      %v262 = vld [vmem:[%s190 + $0x8] sm:$0xff]
      %v263 = vld [vmem:[%s190 + $0x10] sm:$0xff]
      %v264 = vld [vmem:[%s190 + $0x18] sm:$0xff]
      %v265 = vld [vmem:[%s190 + $0x20] sm:$0xff]
      %v266 = vld [vmem:[%s190 + $0x28] sm:$0xff]
      %v267 = vld [vmem:[%s190 + $0x30] sm:$0xff]
      %v268 = vld [vmem:[%s190 + $0x38] sm:$0xff]
      %v269 = vld [vmem:[%s1] sm:$0x3]
      %v272 = vunpack.c.l.s4 1966171168
      %v273 = vunpack.c.0.s8 %v272
      %v274 = vlaneseq
      %v275 = vshrl.u32 %v274, 7
      %v276 = vsub.s32 %v273, %v275
      %v277 = vrot.slane %v269, %v276
      %v278 = vcombine.high %v277, %v277
      %v280 = vunpack.c.l.s4 1966171168
      %v281 = vunpack.c.0.s8 %v280
      %v282 = vlaneseq
      %v283 = vshrl.u32 %v282, 7
      %v284 = vsub.s32 %v281, %v283
      %v285 = vrot.slane %v277, %v284
      %v287 = vunpack.c.l.s4 1966171168
      %v288 = vunpack.c.0.s8 %v287
      %v289 = vlaneseq
      %v290 = vshrl.u32 %v289, 7
      %v291 = vsub.s32 %v288, %v290
      %v292 = vrot.slane %v278, %v291
      %v294 = vpack.i.b16 %v285, %v285
      %v296 = vlaneseq
      %v297 = vshrl.u32 %v296, 7
      %v298 = vsub.s32 0, %v297
      %v299 = vrot.slane %v294, %v298
      %v301 = vpack.i.b16 %v292, %v292
      %v303 = vlaneseq
      %v304 = vshrl.u32 %v303, 7
      %v305 = vsub.s32 0, %v304
      %v306 = vrot.slane %v301, %v305
      %v309 = vunpack.c.l.b16 %v299
      %v310 = vunpack.c.l.b16 %v306
      %v311 = vpack.c.b16 %v310, %v309
      %v313 = vsub.bf16 %v261, %v311
      %v314 = vsub.bf16 %v262, %v311
      %v315 = vsub.bf16 %v263, %v311
      %v316 = vsub.bf16 %v264, %v311
      %v317 = vsub.bf16 %v265, %v311
      %v318 = vsub.bf16 %v266, %v311
      %v319 = vsub.bf16 %v267, %v311
      %v320 = vsub.bf16 %v268, %v311
      %v329 = vunpack.c.l.b16 %v313
      %v330 = vunpack.c.h.b16 %v313
      %v331 = vunpack.c.l.b16 %v314
      %v332 = vunpack.c.h.b16 %v314
      %v333 = vunpack.c.l.b16 %v315
      %v334 = vunpack.c.h.b16 %v315
      %v335 = vunpack.c.l.b16 %v316
      %v336 = vunpack.c.h.b16 %v316
      %v337 = vunpack.c.l.b16 %v317
      %v338 = vunpack.c.h.b16 %v317
      %v339 = vunpack.c.l.b16 %v318
      %v340 = vunpack.c.h.b16 %v318
      %v341 = vunpack.c.l.b16 %v319
      %v342 = vunpack.c.h.b16 %v319
      %v343 = vunpack.c.l.b16 %v320
      %v344 = vunpack.c.h.b16 %v320
      %v345 = vpack.c.b16 %v331, %v329
      %v346 = vpack.c.b16 %v332, %v330
      %v347 = vpack.c.b16 %v335, %v333
      %v348 = vpack.c.b16 %v336, %v334
      %v349 = vpack.c.b16 %v339, %v337
      %v350 = vpack.c.b16 %v340, %v338
      %v351 = vpack.c.b16 %v343, %v341
      %v352 = vpack.c.b16 %v344, %v342
      %vm361 = vcmask 523264
      %v363 = vsel %vm361, 1065369472, 0
      %365 = vmatprep.subr.bf16.mxu0 0
      %366 = vmatpush1.bf16.msra.mxu0 0
      %367 = vmatprep.subr.bf16.mxu0 0
      %368 = vmatpush1.bf16.msra.mxu0 0
      %369 = vmatprep.subr.bf16.mxu0 0
      %370 = vmatpush1.bf16.msra.mxu0 0
      %371 = vmatprep.subr.bf16.mxu0 0
      %372 = vmatpush1.bf16.msra.mxu0 0
      %373 = vmatprep.subr.bf16.mxu0 %v352
      %374 = vmatpush1.bf16.msra.mxu0 %v351
      %375 = vmatprep.subr.bf16.mxu0 %v350
      %376 = vmatpush1.bf16.msra.mxu0 %v349
      %377 = vmatprep.subr.bf16.mxu0 %v348
      %378 = vmatpush1.bf16.msra.mxu0 %v347
      %379 = vmatprep.subr.bf16.mxu0 %v346
      %380 = vmatpush1.bf16.msra.mxu0 %v345
      %381 = vmatprep.subr.bf16.mxu0 0
      %382 = vmatpush2.bf16.msra.mxu0 0
      %383 = vmatprep.subr.bf16.mxu0 0
      %384 = vmatpush2.bf16.msra.mxu0 0
      %385 = vmatprep.subr.bf16.mxu0 0
      %386 = vmatpush2.bf16.msra.mxu0 0
      %387 = vmatprep.subr.bf16.mxu0 0
      %388 = vmatpush2.bf16.msra.mxu0 0
      %389 = vmatprep.subr.bf16.mxu0 0
      %390 = vmatpush2.bf16.msra.mxu0 0
      %391 = vmatprep.subr.bf16.mxu0 0
      %392 = vmatpush2.bf16.msra.mxu0 0
      %393 = vmatprep.subr.bf16.mxu0 0
      %394 = vmatpush2.bf16.msra.mxu0 0
      %395 = vmatprep.subr.bf16.mxu0 0
      %396 = vmatpush2.bf16.msra.mxu0 0
      %397 = vmatprep.mubr.bf16.mxu0 0
      %398 = vmatmul.mubr.bf16.gmra.mxu0 %v363
      %v399 = vpop.f32.mrf.mxu0
      %v400 = vadd.f32 0.0, %v399
      %v401 = vpop.f32.mrf.mxu0
      %v402 = vadd.f32 0.0, %v401
      %v403 = vpop.f32.mrf.mxu0
      %v404 = vpop.f32.mrf.mxu0
      %405 = vdwg.mxu0
      %v406 = vld [vmem:[%s195] sm:$0x3]
      %v409 = vcombine.low %v400, %v402
      %v411 = vunpack.c.l.s4 1966171168
      %v412 = vunpack.c.0.s8 %v411
      %v413 = vlaneseq
      %v414 = vshrl.u32 %v413, 7
      %v415 = vsub.s32 %v412, %v414
      %v416 = vrot.slane %v409, %v415
      %v418 = vunpack.c.l.s4 1966171168
      %v419 = vunpack.c.0.s8 %v418
      %v420 = vlaneseq
      %v421 = vshrl.u32 %v420, 7
      %v422 = vsub.s32 %v419, %v421
      %v423 = vrot.slane %v416, %v422
      %v425 = vadd.f32 %v406, %v423
      %v426 = vlaneseq
      %vm427 = vcmp.ge.s32.totalorder %v426, 0
      %vm428 = vcmp.lt.s32.totalorder %v426, 192
      %vm429 = vmand %vm427, %vm428
      %430 = vst.msk [vmem:[%s195] sm:$0x3] %vm429, %v425
      %431 = vxpose.xlu0.c.b16.start [1/8] %v345, 128
      %432 = vxpose.xlu0.c.b16.cont [2/8] %v347, 128
      %433 = vxpose.xlu0.c.b16.cont [3/8] %v349, 128
      %434 = vxpose.xlu0.c.b16.cont [4/8] %v351, 128
      %435 = vxpose.xlu0.c.b16.cont [5/8] 0, 128
      %436 = vxpose.xlu0.c.b16.cont [6/8] 0, 128
      %437 = vxpose.xlu0.c.b16.cont [7/8] 0, 128
      %438 = vxpose.xlu0.c.b16.end [8/8] 0, 128
      %v439 = vpop.trf.xlu0
      %v440 = vpop.trf.xlu0
      %v441 = vpop.trf.xlu0
      %v442 = vpop.trf.xlu0
      %v443 = vpop.trf.xlu0
      %v444 = vpop.trf.xlu0
      %v445 = vpop.trf.xlu0
      %v446 = vpop.trf.xlu0
      %447 = vxpose.xlu0.c.b16.start [1/8] %v346, 128
      %448 = vxpose.xlu0.c.b16.cont [2/8] %v348, 128
      %449 = vxpose.xlu0.c.b16.cont [3/8] %v350, 128
      %450 = vxpose.xlu0.c.b16.cont [4/8] %v352, 128
      %451 = vxpose.xlu0.c.b16.cont [5/8] 0, 128
      %452 = vxpose.xlu0.c.b16.cont [6/8] 0, 128
      %453 = vxpose.xlu0.c.b16.cont [7/8] 0, 128
      %454 = vxpose.xlu0.c.b16.end [8/8] 0, 128
      %v455 = vpop.trf.xlu0
      %v456 = vpop.trf.xlu0
      %v457 = vpop.trf.xlu0
      %v458 = vpop.trf.xlu0
      %v459 = vpop.trf.xlu0
      %v460 = vpop.trf.xlu0
      %v461 = vpop.trf.xlu0
      %v462 = vpop.trf.xlu0
      %v464 = vsel %vm361, %v439, 0
      %v467 = vsel %vm361, %v440, 0
      %v470 = vsel %vm361, %v441, 0
      %v473 = vsel %vm361, %v442, 0
      %v476 = vsel %vm361, %v443, 0
      %v479 = vsel %vm361, %v444, 0
      %v482 = vsel %vm361, %v445, 0
      %v485 = vsel %vm361, %v446, 0
      %v488 = vsel %vm361, %v455, 0
      %v491 = vsel %vm361, %v456, 0
      %v494 = vsel %vm361, %v457, 0
      %v497 = vsel %vm361, %v458, 0
      %499 = vmatprep.subr.bf16.mxu0 0
      %500 = vmatpush1.bf16.msra.mxu0 0
      %501 = vmatprep.subr.bf16.mxu0 0
      %502 = vmatpush1.bf16.msra.mxu0 0
      %503 = vmatprep.subr.bf16.mxu0 0
      %504 = vmatpush1.bf16.msra.mxu0 0
      %505 = vmatprep.subr.bf16.mxu0 0
      %506 = vmatpush1.bf16.msra.mxu0 0
      %507 = vmatprep.subr.bf16.mxu0 %v352
      %508 = vmatpush1.bf16.msra.mxu0 %v351
      %509 = vmatprep.subr.bf16.mxu0 %v350
      %510 = vmatpush1.bf16.msra.mxu0 %v349
      %511 = vmatprep.subr.bf16.mxu0 %v348
      %512 = vmatpush1.bf16.msra.mxu0 %v347
      %513 = vmatprep.subr.bf16.mxu0 %v346
      %514 = vmatpush1.bf16.msra.mxu0 %v345
      %515 = vmatprep.subr.bf16.mxu0 0
      %516 = vmatpush2.bf16.msra.mxu0 0
      %517 = vmatprep.subr.bf16.mxu0 0
      %518 = vmatpush2.bf16.msra.mxu0 0
      %519 = vmatprep.subr.bf16.mxu0 0
      %520 = vmatpush2.bf16.msra.mxu0 0
      %521 = vmatprep.subr.bf16.mxu0 0
      %522 = vmatpush2.bf16.msra.mxu0 0
      %523 = vmatprep.subr.bf16.mxu0 0
      %524 = vmatpush2.bf16.msra.mxu0 0
      %525 = vmatprep.subr.bf16.mxu0 0
      %526 = vmatpush2.bf16.msra.mxu0 0
      %527 = vmatprep.subr.bf16.mxu0 0
      %528 = vmatpush2.bf16.msra.mxu0 0
      %529 = vmatprep.subr.bf16.mxu0 0
      %530 = vmatpush2.bf16.msra.mxu0 0
      %531 = vmatprep.mubr.bf16.mxu0 0
      %532 = vmatmul.mubr.bf16.gmra.mxu0 %v464
      %v533 = vpop.f32.mrf.mxu0
      %v534 = vadd.f32 0.0, %v533
      %v535 = vpop.f32.mrf.mxu0
      %v536 = vadd.f32 0.0, %v535
      %v537 = vpop.f32.mrf.mxu0
      %v538 = vadd.f32 0.0, %v537
      %v539 = vpop.f32.mrf.mxu0
      %v540 = vadd.f32 0.0, %v539
      %541 = vmatprep.mubr.bf16.mxu0 0
      %542 = vmatmul.mubr.bf16.gmra.mxu0 %v467
      %v543 = vpop.f32.mrf.mxu0
      %v544 = vadd.f32 0.0, %v543
      %v545 = vpop.f32.mrf.mxu0
      %v546 = vadd.f32 0.0, %v545
      %v547 = vpop.f32.mrf.mxu0
      %v548 = vadd.f32 0.0, %v547
      %v549 = vpop.f32.mrf.mxu0
      %v550 = vadd.f32 0.0, %v549
      %551 = vmatprep.mubr.bf16.mxu0 0
      %552 = vmatmul.mubr.bf16.gmra.mxu0 %v470
      %v553 = vpop.f32.mrf.mxu0
      %v554 = vadd.f32 0.0, %v553
      %v555 = vpop.f32.mrf.mxu0
      %v556 = vadd.f32 0.0, %v555
      %v557 = vpop.f32.mrf.mxu0
      %v558 = vadd.f32 0.0, %v557
      %v559 = vpop.f32.mrf.mxu0
      %v560 = vadd.f32 0.0, %v559
      %561 = vmatprep.mubr.bf16.mxu0 0
      %562 = vmatmul.mubr.bf16.gmra.mxu0 %v473
      %v563 = vpop.f32.mrf.mxu0
      %v564 = vadd.f32 0.0, %v563
      %v565 = vpop.f32.mrf.mxu0
      %v566 = vadd.f32 0.0, %v565
      %v567 = vpop.f32.mrf.mxu0
      %v568 = vadd.f32 0.0, %v567
      %v569 = vpop.f32.mrf.mxu0
      %v570 = vadd.f32 0.0, %v569
      %571 = vmatprep.mubr.bf16.mxu0 0
      %572 = vmatmul.mubr.bf16.gmra.mxu0 %v476
      %v573 = vpop.f32.mrf.mxu0
      %v574 = vadd.f32 0.0, %v573
      %v575 = vpop.f32.mrf.mxu0
      %v576 = vadd.f32 0.0, %v575
      %v577 = vpop.f32.mrf.mxu0
      %v578 = vadd.f32 0.0, %v577
      %v579 = vpop.f32.mrf.mxu0
      %v580 = vadd.f32 0.0, %v579
      %581 = vmatprep.mubr.bf16.mxu0 0
      %582 = vmatmul.mubr.bf16.gmra.mxu0 %v479
      %v583 = vpop.f32.mrf.mxu0
      %v584 = vadd.f32 0.0, %v583
      %v585 = vpop.f32.mrf.mxu0
      %v586 = vadd.f32 0.0, %v585
      %v587 = vpop.f32.mrf.mxu0
      %v588 = vadd.f32 0.0, %v587
      %v589 = vpop.f32.mrf.mxu0
      %v590 = vadd.f32 0.0, %v589
      %591 = vmatprep.mubr.bf16.mxu0 0
      %592 = vmatmul.mubr.bf16.gmra.mxu0 %v482
      %v593 = vpop.f32.mrf.mxu0
      %v594 = vadd.f32 0.0, %v593
      %v595 = vpop.f32.mrf.mxu0
      %v596 = vadd.f32 0.0, %v595
      %v597 = vpop.f32.mrf.mxu0
      %v598 = vadd.f32 0.0, %v597
      %v599 = vpop.f32.mrf.mxu0
      %v600 = vadd.f32 0.0, %v599
      %601 = vmatprep.mubr.bf16.mxu0 0
      %602 = vmatmul.mubr.bf16.gmra.mxu0 %v485
      %v603 = vpop.f32.mrf.mxu0
      %v604 = vadd.f32 0.0, %v603
      %v605 = vpop.f32.mrf.mxu0
      %v606 = vadd.f32 0.0, %v605
      %v607 = vpop.f32.mrf.mxu0
      %v608 = vadd.f32 0.0, %v607
      %v609 = vpop.f32.mrf.mxu0
      %v610 = vadd.f32 0.0, %v609
      %611 = vmatprep.mubr.bf16.mxu0 0
      %612 = vmatmul.mubr.bf16.gmra.mxu0 %v488
      %v613 = vpop.f32.mrf.mxu0
      %v614 = vadd.f32 0.0, %v613
      %v615 = vpop.f32.mrf.mxu0
      %v616 = vadd.f32 0.0, %v615
      %v617 = vpop.f32.mrf.mxu0
      %v618 = vadd.f32 0.0, %v617
      %v619 = vpop.f32.mrf.mxu0
      %v620 = vadd.f32 0.0, %v619
      %621 = vmatprep.mubr.bf16.mxu0 0
      %622 = vmatmul.mubr.bf16.gmra.mxu0 %v491
      %v623 = vpop.f32.mrf.mxu0
      %v624 = vadd.f32 0.0, %v623
      %v625 = vpop.f32.mrf.mxu0
      %v626 = vadd.f32 0.0, %v625
      %v627 = vpop.f32.mrf.mxu0
      %v628 = vadd.f32 0.0, %v627
      %v629 = vpop.f32.mrf.mxu0
      %v630 = vadd.f32 0.0, %v629
      %631 = vmatprep.mubr.bf16.mxu0 0
      %632 = vmatmul.mubr.bf16.gmra.mxu0 %v494
      %v633 = vpop.f32.mrf.mxu0
      %v634 = vadd.f32 0.0, %v633
      %v635 = vpop.f32.mrf.mxu0
      %v636 = vadd.f32 0.0, %v635
      %v637 = vpop.f32.mrf.mxu0
      %v638 = vadd.f32 0.0, %v637
      %v639 = vpop.f32.mrf.mxu0
      %v640 = vadd.f32 0.0, %v639
      %641 = vmatprep.mubr.bf16.mxu0 0
      %642 = vmatmul.mubr.bf16.gmra.mxu0 %v497
      %v643 = vpop.f32.mrf.mxu0
      %v644 = vadd.f32 0.0, %v643
      %v645 = vpop.f32.mrf.mxu0
      %v646 = vadd.f32 0.0, %v645
      %v647 = vpop.f32.mrf.mxu0
      %v648 = vadd.f32 0.0, %v647
      %v649 = vpop.f32.mrf.mxu0
      %v650 = vadd.f32 0.0, %v649
      %651 = vdwg.mxu0
      %v652 = vld [vmem:[%s200] sm:$0xff]
      %v653 = vld [vmem:[%s200 + $0x8] sm:$0xff]
      %v654 = vld [vmem:[%s200 + $0x10] sm:$0xff]
      %v655 = vld [vmem:[%s200 + $0x18] sm:$0xff]
      %v656 = vld [vmem:[%s200 + $0x20] sm:$0xff]
      %v657 = vld [vmem:[%s200 + $0x28] sm:$0xff]
      %v658 = vld [vmem:[%s200 + $0x30] sm:$0xff]
      %v659 = vld [vmem:[%s200 + $0x38] sm:$0xff]
      %v660 = vld [vmem:[%s200 + $0x40] sm:$0xff]
      %v661 = vld [vmem:[%s200 + $0x48] sm:$0xff]
      %v662 = vld [vmem:[%s200 + $0x50] sm:$0xff]
      %v663 = vld [vmem:[%s200 + $0x58] sm:$0xff]
      %v664 = vld [vmem:[%s200 + $0x60] sm:$0xff]
      %v665 = vld [vmem:[%s200 + $0x68] sm:$0xff]
      %v666 = vld [vmem:[%s200 + $0x70] sm:$0xff]
      %v667 = vld [vmem:[%s200 + $0x78] sm:$0xff]
      %v668 = vld [vmem:[%s200 + $0x80] sm:$0xff]
      %v669 = vld [vmem:[%s200 + $0x88] sm:$0xff]
      %v670 = vld [vmem:[%s200 + $0x90] sm:$0xff]
      %v671 = vld [vmem:[%s200 + $0x98] sm:$0xff]
      %v672 = vld [vmem:[%s200 + $0xa0] sm:$0xff]
      %v673 = vld [vmem:[%s200 + $0xa8] sm:$0xff]
      %v674 = vld [vmem:[%s200 + $0xb0] sm:$0xff]
      %v675 = vld [vmem:[%s200 + $0xb8] sm:$0xff]
      %v676 = vld [vmem:[%s200 + $0xc0] sm:$0xff]
      %v677 = vld [vmem:[%s200 + $0xc8] sm:$0xff]
      %v678 = vld [vmem:[%s200 + $0xd0] sm:$0xff]
      %v679 = vld [vmem:[%s200 + $0xd8] sm:$0xff]
      %v680 = vld [vmem:[%s200 + $0xe0] sm:$0xff]
      %v681 = vld [vmem:[%s200 + $0xe8] sm:$0xff]
      %v682 = vld [vmem:[%s200 + $0xf0] sm:$0xff]
      %v683 = vld [vmem:[%s200 + $0xf8] sm:$0xff]
      %v684 = vld [vmem:[%s200 + $0x100] sm:$0xff]
      %v685 = vld [vmem:[%s200 + $0x108] sm:$0xff]
      %v686 = vld [vmem:[%s200 + $0x110] sm:$0xff]
      %v687 = vld [vmem:[%s200 + $0x118] sm:$0xff]
      %v688 = vld [vmem:[%s200 + $0x120] sm:$0xff]
      %v689 = vld [vmem:[%s200 + $0x128] sm:$0xff]
      %v690 = vld [vmem:[%s200 + $0x130] sm:$0xff]
      %v691 = vld [vmem:[%s200 + $0x138] sm:$0xff]
      %v692 = vld [vmem:[%s200 + $0x140] sm:$0xff]
      %v693 = vld [vmem:[%s200 + $0x148] sm:$0xff]
      %v694 = vld [vmem:[%s200 + $0x150] sm:$0xff]
      %v695 = vld [vmem:[%s200 + $0x158] sm:$0xff]
      %v696 = vld [vmem:[%s200 + $0x160] sm:$0xff]
      %v697 = vld [vmem:[%s200 + $0x168] sm:$0xff]
      %v698 = vld [vmem:[%s200 + $0x170] sm:$0xff]
      %v699 = vld [vmem:[%s200 + $0x178] sm:$0xff]
      %v700 = vadd.f32 %v652, %v534
      %v701 = vadd.f32 %v653, %v536
      %v702 = vadd.f32 %v654, %v538
      %v703 = vadd.f32 %v655, %v540
      %v704 = vadd.f32 %v656, %v544
      %v705 = vadd.f32 %v657, %v546
      %v706 = vadd.f32 %v658, %v548
      %v707 = vadd.f32 %v659, %v550
      %v708 = vadd.f32 %v660, %v554
      %v709 = vadd.f32 %v661, %v556
      %v710 = vadd.f32 %v662, %v558
      %v711 = vadd.f32 %v663, %v560
      %v712 = vadd.f32 %v664, %v564
      %v713 = vadd.f32 %v665, %v566
      %v714 = vadd.f32 %v666, %v568
      %v715 = vadd.f32 %v667, %v570
      %v716 = vadd.f32 %v668, %v574
      %v717 = vadd.f32 %v669, %v576
      %v718 = vadd.f32 %v670, %v578
      %v719 = vadd.f32 %v671, %v580
      %v720 = vadd.f32 %v672, %v584
      %v721 = vadd.f32 %v673, %v586
      %v722 = vadd.f32 %v674, %v588
      %v723 = vadd.f32 %v675, %v590
      %v724 = vadd.f32 %v676, %v594
      %v725 = vadd.f32 %v677, %v596
      %v726 = vadd.f32 %v678, %v598
      %v727 = vadd.f32 %v679, %v600
      %v728 = vadd.f32 %v680, %v604
      %v729 = vadd.f32 %v681, %v606
      %v730 = vadd.f32 %v682, %v608
      %v731 = vadd.f32 %v683, %v610
      %v732 = vadd.f32 %v684, %v614
      %v733 = vadd.f32 %v685, %v616
      %v734 = vadd.f32 %v686, %v618
      %v735 = vadd.f32 %v687, %v620
      %v736 = vadd.f32 %v688, %v624
      %v737 = vadd.f32 %v689, %v626
      %v738 = vadd.f32 %v690, %v628
      %v739 = vadd.f32 %v691, %v630
      %v740 = vadd.f32 %v692, %v634
      %v741 = vadd.f32 %v693, %v636
      %v742 = vadd.f32 %v694, %v638
      %v743 = vadd.f32 %v695, %v640
      %v744 = vadd.f32 %v696, %v644
      %v745 = vadd.f32 %v697, %v646
      %v746 = vadd.f32 %v698, %v648
      %v747 = vadd.f32 %v699, %v650
      %748 = vst [vmem:[%s200] sm:$0xff] %v700
      %749 = vst.msk [vmem:[%s200 + $0x8] sm:$0xff] %vm361, %v701
      %750 = vst [vmem:[%s200 + $0x10] sm:$0xff] %v702
      %751 = vst.msk [vmem:[%s200 + $0x18] sm:$0xff] %vm361, %v703
      %752 = vst [vmem:[%s200 + $0x20] sm:$0xff] %v704
      %753 = vst.msk [vmem:[%s200 + $0x28] sm:$0xff] %vm361, %v705
      %754 = vst [vmem:[%s200 + $0x30] sm:$0xff] %v706
      %755 = vst.msk [vmem:[%s200 + $0x38] sm:$0xff] %vm361, %v707
      %756 = vst [vmem:[%s200 + $0x40] sm:$0xff] %v708
      %757 = vst.msk [vmem:[%s200 + $0x48] sm:$0xff] %vm361, %v709
      %758 = vst [vmem:[%s200 + $0x50] sm:$0xff] %v710
      %759 = vst.msk [vmem:[%s200 + $0x58] sm:$0xff] %vm361, %v711
      %760 = vst [vmem:[%s200 + $0x60] sm:$0xff] %v712
      %761 = vst.msk [vmem:[%s200 + $0x68] sm:$0xff] %vm361, %v713
      %762 = vst [vmem:[%s200 + $0x70] sm:$0xff] %v714
      %763 = vst.msk [vmem:[%s200 + $0x78] sm:$0xff] %vm361, %v715
      %764 = vst [vmem:[%s200 + $0x80] sm:$0xff] %v716
      %765 = vst.msk [vmem:[%s200 + $0x88] sm:$0xff] %vm361, %v717
      %766 = vst [vmem:[%s200 + $0x90] sm:$0xff] %v718
      %767 = vst.msk [vmem:[%s200 + $0x98] sm:$0xff] %vm361, %v719
      %768 = vst [vmem:[%s200 + $0xa0] sm:$0xff] %v720
      %769 = vst.msk [vmem:[%s200 + $0xa8] sm:$0xff] %vm361, %v721
      %770 = vst [vmem:[%s200 + $0xb0] sm:$0xff] %v722
      %771 = vst.msk [vmem:[%s200 + $0xb8] sm:$0xff] %vm361, %v723
      %772 = vst [vmem:[%s200 + $0xc0] sm:$0xff] %v724
      %773 = vst.msk [vmem:[%s200 + $0xc8] sm:$0xff] %vm361, %v725
      %774 = vst [vmem:[%s200 + $0xd0] sm:$0xff] %v726
      %775 = vst.msk [vmem:[%s200 + $0xd8] sm:$0xff] %vm361, %v727
      %776 = vst [vmem:[%s200 + $0xe0] sm:$0xff] %v728
      %777 = vst.msk [vmem:[%s200 + $0xe8] sm:$0xff] %vm361, %v729
      %778 = vst [vmem:[%s200 + $0xf0] sm:$0xff] %v730
      %779 = vst.msk [vmem:[%s200 + $0xf8] sm:$0xff] %vm361, %v731
      %780 = vst [vmem:[%s200 + $0x100] sm:$0xff] %v732
      %781 = vst.msk [vmem:[%s200 + $0x108] sm:$0xff] %vm361, %v733
      %782 = vst [vmem:[%s200 + $0x110] sm:$0xff] %v734
      %783 = vst.msk [vmem:[%s200 + $0x118] sm:$0xff] %vm361, %v735
      %784 = vst [vmem:[%s200 + $0x120] sm:$0xff] %v736
      %785 = vst.msk [vmem:[%s200 + $0x128] sm:$0xff] %vm361, %v737
      %786 = vst [vmem:[%s200 + $0x130] sm:$0xff] %v738
      %787 = vst.msk [vmem:[%s200 + $0x138] sm:$0xff] %vm361, %v739
      %788 = vst [vmem:[%s200 + $0x140] sm:$0xff] %v740
      %789 = vst.msk [vmem:[%s200 + $0x148] sm:$0xff] %vm361, %v741
      %790 = vst [vmem:[%s200 + $0x150] sm:$0xff] %v742
      %791 = vst.msk [vmem:[%s200 + $0x158] sm:$0xff] %vm361, %v743
      %792 = vst [vmem:[%s200 + $0x160] sm:$0xff] %v744
      %793 = vst.msk [vmem:[%s200 + $0x168] sm:$0xff] %vm361, %v745
      %794 = vst [vmem:[%s200 + $0x170] sm:$0xff] %v746
      %795 = vst.msk [vmem:[%s200 + $0x178] sm:$0xff] %vm361, %v747
      %p796 = scmp.lt.s32.totalorder %s19, 1
      %s797 = scalar_select %p796, %s19, 1
      %s798 = smul.addr %s797, 2
      %s799 = scalar_lea.vmem %s2, %s798
      %p800 = scmp.lt.s32.totalorder %s19, 1
      %s801 = scalar_select %p800, %s19, 1
      %s802 = smul.addr %s801, 48
      %s803 = smul.addr %s802, 8
      %s804 = scalar_lea.vmem %s3, %s803
      // Predicated region
      $region33: #{conv_patching_rgb2_forward.2} parent=27 // pred_check
        %p805 = pneg %p94
      $region34: #{conv_patching_rgb2_forward.2} parent=27 // pred_check_branch
        %807 = sbr.rel (%p805) target = $region36
      $region35: #{conv_patching_rgb2_forward.2} parent=27 // pred_region
        _
      $region36: #{conv_patching_rgb2_forward.2} parent=27 // pred_fallthru
        _
      // Predicated region
      $region37: #{conv_patching_rgb2_forward.2} parent=27 // pred_check
        %p808 = pneg %p120
      $region38: #{conv_patching_rgb2_forward.2} parent=27 // pred_check_branch
        %810 = sbr.rel (%p808) target = $region40
      $region39: #{conv_patching_rgb2_forward.2} parent=27 // pred_region
        _
      $region40: #{conv_patching_rgb2_forward.2} parent=27 // pred_fallthru
        _
    $region28: #{conv_patching_rgb2_forward.2} parent=5 // pred_fallthru
      _
    %p811 = scmp.le.s32.totalorder 2, %s10
    // Predicated region
    $region41: #{conv_patching_rgb2_forward.2} parent=5 // pred_check
      %p812 = pneg %p811
    $region42: #{conv_patching_rgb2_forward.2} parent=5 // pred_check_branch
      %814 = sbr.rel (%p812) target = $region44
    $region43: #{conv_patching_rgb2_forward.2} parent=5 // pred_region
      %s815 = ssub.s32 %s10, 2
      // Predicated region
      $region45: #{conv_patching_rgb2_forward.2} parent=43 // pred_check
        %p816 = pneg %p100
      $region46: #{conv_patching_rgb2_forward.2} parent=43 // pred_check_branch
        %818 = sbr.rel (%p816) target = $region48
      $region47: #{conv_patching_rgb2_forward.2} parent=43 // pred_region
        %p819 = scmp.lt.s32.totalorder %s21, 1
        %s820 = scalar_select %p819, %s21, 1
        %s821 = smul.addr %s820, 2
        %s822 = scalar_lea.vmem %s2, %s821
      $region48: #{conv_patching_rgb2_forward.2} parent=43 // pred_fallthru
        _
      // Predicated region
      $region49: #{conv_patching_rgb2_forward.2} parent=43 // pred_check
        %p823 = pneg %p126
      $region50: #{conv_patching_rgb2_forward.2} parent=43 // pred_check_branch
        %825 = sbr.rel (%p823) target = $region52
      $region51: #{conv_patching_rgb2_forward.2} parent=43 // pred_region
        %p826 = scmp.lt.s32.totalorder %s21, 1
        %s827 = scalar_select %p826, %s21, 1
        %s828 = smul.addr %s827, 48
        %s829 = smul.addr %s828, 8
        %s830 = scalar_lea.vmem %s3, %s829
      $region52: #{conv_patching_rgb2_forward.2} parent=43 // pred_fallthru
        _
    $region44: #{conv_patching_rgb2_forward.2} parent=5 // pred_fallthru
      _
  $region6: #{conv_patching_rgb2_forward.2} parent=0 // loop_footer
    %s14 = sadd.s32 1, %s10
  $region7: #{conv_patching_rgb2_forward.2} parent=0 // loop_footer_branch
    %9 = sbr.rel target = $region3
  $region8: #{conv_patching_rgb2_forward.2} parent=0 // loop_exit
    _

// kernel: conv_patching_rgb2_forward.3
$region0: #{conv_patching_rgb2_forward.3}
  #allocation0 [shape = 'u32[]', space=smem, size = 0x4, offset = 0x4, fixed_abs, tag = 'smem constant byte address 0x4 - core index']
  #allocation1 [shape = 'u32[144,128]{1,0:T(1,128)}', space=vmem, size = 0x12000, scoped, tag = 'internal scratch']
  %s0 = inlined_call_operand.vmem [shape: bf16[2,64,192], index: 0, kind: input, shape index: {}]
  %s1 = inlined_call_operand.vmem [shape: bf16[192,768], index: 1, kind: input, shape index: {}]
  %s2 = inlined_call_operand.vmem [shape: f32[1,768], index: 2, kind: input, shape index: {}]
  %s3 = inlined_call_operand.vmem [shape: f32[1,768], index: 3, kind: input, shape index: {}]
  %s4 = inlined_call_operand.vmem [shape: f32[1,64,768], index: 4, kind: input, shape index: {}]
  %s5 = inlined_call_operand.hbm [shape: f32[2,64,768], index: 5, kind: output, shape index: {}]
  %s6 = sld [smem:[#allocation0]]
  $region53: #{conv_patching_rgb2_forward.3} parent=0
    _
  %s8 = ssub.s32 1, %s6
  %s9 = scalar_select 0, %s8, %s6
  $region1: #{conv_patching_rgb2_forward.3} parent=0
    #allocation2 [shape = 'u8[393216]{0}', space=vmem, size = 0x60000, scoped, tag = 'output window, operand 0']
    #allocation3 [shape = 's32[2]{0}', space=sflag, size = 0x8, scoped, tag = 'scoped memory for conv_patching_rgb2_forward.3']
    %10 = vsyncpa [#allocation3], 0
    %s11 = scalar_lea.sflag [#allocation3], 1
    %12 = vsyncpa %s11, 0
    loop: start=0, step=1, limit=4
    $region2: #{conv_patching_rgb2_forward.3} parent=1 // loop_pre_header
      _
    $region3: #{conv_patching_rgb2_forward.3} parent=1 // loop_header
      %s14 = sphi 0, %s18
      %p15 = scmp.ge.s32.totalorder %s14, 4
      %s24 = sphi 0, %s26
      %s27 = sphi 0, %s24
      %s28 = sphi 0, %s27
      %s44 = sphi 0, %s28
      %s48 = sphi 0, %s48
      %s50 = sphi 0, %s48
      %s51 = sphi 0, %s50
      %s65 = sphi 0, %s51
      %s69 = sphi 0, %s69
      %s71 = sphi 0, %s69
      %s72 = sphi 0, %s71
      %s86 = sphi 0, %s72
      %s90 = sphi 0, %s90
      %s92 = sphi 0, %s90
      %s93 = sphi 0, %s92
      %s107 = sphi 0, %s93
      %s111 = sphi 0, %s111
      %s113 = sphi 0, %s111
      %s114 = sphi 0, %s113
      %s128 = sphi 0, %s114
      %s134 = sphi 0, %s136
      %s137 = sphi 0, %s134
      %s138 = sphi 0, %s137
      %s154 = sphi 0, %s138
    $region4: #{conv_patching_rgb2_forward.3} parent=1 // loop_header_branch
      %17 = sbr.rel (%p15) target = $region8
    $region5: #{conv_patching_rgb2_forward.3} parent=1 // loop_body
      %s19 = ssub.s32 %s14, 1
      %s20 = ssub.s32 %s14, 2
      %s21 = sadd.s32 %s14, 1
      %s22 = ssub.s32 %s14, %s21
      %p23 = scmp.eq.s32.totalorder %s22, 0
      %s25 = sadd.s32 %s24, 1
      %s26 = scalar_select %p23, %s24, %s25
      %p29 = pneg %p23
      %p30 = scmp.eq.s32.totalorder %s14, 1
      %p31 = por %p29, %p30
      %p32 = scmp.ne.s32.totalorder %s24, %s27
      %p33 = scmp.eq.s32.totalorder %s14, 0
      %p34 = por %p32, %p33
      %p35 = scmp.ne.s32.totalorder %s24, %s27
      %p36 = scmp.eq.s32.totalorder %s19, 1
      %p37 = por %p35, %p36
      %p38 = scmp.ne.s32.totalorder %s27, %s28
      %p39 = scmp.eq.s32.totalorder %s19, 0
      %p40 = por %p38, %p39
      %p41 = scmp.ne.s32.totalorder %s27, %s28
      %p42 = scmp.eq.s32.totalorder %s20, 1
      %p43 = por %p41, %p42
      %p45 = scmp.ne.s32.totalorder %s28, %s44
      %p46 = scmp.eq.s32.totalorder %s20, 0
      %p47 = por %p45, %p46
      %s49 = sadd.s32 %s48, 1
      %p52 = scmp.eq.s32.totalorder %s14, 1
      %p53 = scmp.ne.s32.totalorder %s48, %s50
      %p54 = scmp.eq.s32.totalorder %s14, 0
      %p55 = por %p53, %p54
      %p56 = scmp.ne.s32.totalorder %s48, %s50
      %p57 = scmp.eq.s32.totalorder %s19, 1
      %p58 = por %p56, %p57
      %p59 = scmp.ne.s32.totalorder %s50, %s51
      %p60 = scmp.eq.s32.totalorder %s19, 0
      %p61 = por %p59, %p60
      %p62 = scmp.ne.s32.totalorder %s50, %s51
      %p63 = scmp.eq.s32.totalorder %s20, 1
      %p64 = por %p62, %p63
      %p66 = scmp.ne.s32.totalorder %s51, %s65
      %p67 = scmp.eq.s32.totalorder %s20, 0
      %p68 = por %p66, %p67
      %s70 = sadd.s32 %s69, 1
      %p73 = scmp.eq.s32.totalorder %s14, 1
      %p74 = scmp.ne.s32.totalorder %s69, %s71
      %p75 = scmp.eq.s32.totalorder %s14, 0
      %p76 = por %p74, %p75
      %p77 = scmp.ne.s32.totalorder %s69, %s71
      %p78 = scmp.eq.s32.totalorder %s19, 1
      %p79 = por %p77, %p78
      %p80 = scmp.ne.s32.totalorder %s71, %s72
      %p81 = scmp.eq.s32.totalorder %s19, 0
      %p82 = por %p80, %p81
      %p83 = scmp.ne.s32.totalorder %s71, %s72
      %p84 = scmp.eq.s32.totalorder %s20, 1
      %p85 = por %p83, %p84
      %p87 = scmp.ne.s32.totalorder %s72, %s86
      %p88 = scmp.eq.s32.totalorder %s20, 0
      %p89 = por %p87, %p88
      %s91 = sadd.s32 %s90, 1
      %p94 = scmp.eq.s32.totalorder %s14, 1
      %p95 = scmp.ne.s32.totalorder %s90, %s92
      %p96 = scmp.eq.s32.totalorder %s14, 0
      %p97 = por %p95, %p96
      %p98 = scmp.ne.s32.totalorder %s90, %s92
      %p99 = scmp.eq.s32.totalorder %s19, 1
      %p100 = por %p98, %p99
      %p101 = scmp.ne.s32.totalorder %s92, %s93
      %p102 = scmp.eq.s32.totalorder %s19, 0
      %p103 = por %p101, %p102
      %p104 = scmp.ne.s32.totalorder %s92, %s93
      %p105 = scmp.eq.s32.totalorder %s20, 1
      %p106 = por %p104, %p105
      %p108 = scmp.ne.s32.totalorder %s93, %s107
      %p109 = scmp.eq.s32.totalorder %s20, 0
      %p110 = por %p108, %p109
      %s112 = sadd.s32 %s111, 1
      %p115 = scmp.eq.s32.totalorder %s14, 1
      %p116 = scmp.ne.s32.totalorder %s111, %s113
      %p117 = scmp.eq.s32.totalorder %s14, 0
      %p118 = por %p116, %p117
      %p119 = scmp.ne.s32.totalorder %s111, %s113
      %p120 = scmp.eq.s32.totalorder %s19, 1
      %p121 = por %p119, %p120
      %p122 = scmp.ne.s32.totalorder %s113, %s114
      %p123 = scmp.eq.s32.totalorder %s19, 0
      %p124 = por %p122, %p123
      %p125 = scmp.ne.s32.totalorder %s113, %s114
      %p126 = scmp.eq.s32.totalorder %s20, 1
      %p127 = por %p125, %p126
      %p129 = scmp.ne.s32.totalorder %s114, %s128
      %p130 = scmp.eq.s32.totalorder %s20, 0
      %p131 = por %p129, %p130
      %s132 = ssub.s32 %s14, %s21
      %p133 = scmp.eq.s32.totalorder %s132, 0
      %s135 = sadd.s32 %s134, 1
      %s136 = scalar_select %p133, %s134, %s135
      %p139 = pneg %p133
      %p140 = scmp.eq.s32.totalorder %s14, 1
      %p141 = por %p139, %p140
      %p142 = scmp.ne.s32.totalorder %s134, %s137
      %p143 = scmp.eq.s32.totalorder %s14, 0
      %p144 = por %p142, %p143
      %p145 = scmp.ne.s32.totalorder %s134, %s137
      %p146 = scmp.eq.s32.totalorder %s19, 1
      %p147 = por %p145, %p146
      %p148 = scmp.ne.s32.totalorder %s137, %s138
      %p149 = scmp.eq.s32.totalorder %s19, 0
      %p150 = por %p148, %p149
      %p151 = scmp.ne.s32.totalorder %s137, %s138
      %p152 = scmp.eq.s32.totalorder %s20, 1
      %p153 = por %p151, %p152
      %p155 = scmp.ne.s32.totalorder %s138, %s154
      %p156 = scmp.eq.s32.totalorder %s20, 0
      %p157 = por %p155, %p156
      %p158 = scmp.le.s32.totalorder 1, %s14
      %p159 = scmp.lt.s32.totalorder %s14, 3
      %p160 = pnand %p158, %p159
      %p161 = pneg %p160
      // Predicated region
      $region9: #{conv_patching_rgb2_forward.3} parent=5 // pred_check
        _
      $region10: #{conv_patching_rgb2_forward.3} parent=5 // pred_check_branch
        %163 = sbr.rel (%p160) target = $region12
      $region11: #{conv_patching_rgb2_forward.3} parent=5 // pred_region
        %s164 = ssub.s32 %s14, 1
        // Predicated region
        $region13: #{conv_patching_rgb2_forward.3} parent=11 // pred_check
          %p165 = pneg %p61
        $region14: #{conv_patching_rgb2_forward.3} parent=11 // pred_check_branch
          %167 = sbr.rel (%p165) target = $region16
        $region15: #{conv_patching_rgb2_forward.3} parent=11 // pred_region
          _
        $region16: #{conv_patching_rgb2_forward.3} parent=11 // pred_fallthru
          _
        // Predicated region
        $region17: #{conv_patching_rgb2_forward.3} parent=11 // pred_check
          %p168 = pneg %p82
        $region18: #{conv_patching_rgb2_forward.3} parent=11 // pred_check_branch
          %170 = sbr.rel (%p168) target = $region20
        $region19: #{conv_patching_rgb2_forward.3} parent=11 // pred_region
          _
        $region20: #{conv_patching_rgb2_forward.3} parent=11 // pred_fallthru
          _
        // Predicated region
        $region21: #{conv_patching_rgb2_forward.3} parent=11 // pred_check
          %p171 = pneg %p103
        $region22: #{conv_patching_rgb2_forward.3} parent=11 // pred_check_branch
          %173 = sbr.rel (%p171) target = $region24
        $region23: #{conv_patching_rgb2_forward.3} parent=11 // pred_region
          _
        $region24: #{conv_patching_rgb2_forward.3} parent=11 // pred_fallthru
          _
        // Predicated region
        $region25: #{conv_patching_rgb2_forward.3} parent=11 // pred_check
          %p174 = pneg %p124
        $region26: #{conv_patching_rgb2_forward.3} parent=11 // pred_check_branch
          %176 = sbr.rel (%p174) target = $region28
        $region27: #{conv_patching_rgb2_forward.3} parent=11 // pred_region
          _
        $region28: #{conv_patching_rgb2_forward.3} parent=11 // pred_fallthru
          _
      $region12: #{conv_patching_rgb2_forward.3} parent=5 // pred_fallthru
        _
      %p177 = scmp.lt.s32.totalorder %s14, 2
      // Predicated region
      $region29: #{conv_patching_rgb2_forward.3} parent=5 // pred_check
        %p178 = pneg %p177
      $region30: #{conv_patching_rgb2_forward.3} parent=5 // pred_check_branch
        %180 = sbr.rel (%p178) target = $region32
      $region31: #{conv_patching_rgb2_forward.3} parent=5 // pred_region
        // Predicated region
        $region33: #{conv_patching_rgb2_forward.3} parent=31 // pred_check
          %p181 = pneg %p34
        $region34: #{conv_patching_rgb2_forward.3} parent=31 // pred_check_branch
          %183 = sbr.rel (%p181) target = $region36
        $region35: #{conv_patching_rgb2_forward.3} parent=31 // pred_region
          %p184 = scmp.lt.s32.totalorder %s14, 1
          %s185 = scalar_select %p184, %s14, 1
          %s186 = smul.addr %s185, 16
          %s187 = smul.addr %s186, 4
          %s188 = scalar_lea.vmem %s0, %s187
        $region36: #{conv_patching_rgb2_forward.3} parent=31 // pred_fallthru
          _
      $region32: #{conv_patching_rgb2_forward.3} parent=5 // pred_fallthru
        _
      %p189 = scmp.le.s32.totalorder 1, %s14
      %p190 = scmp.lt.s32.totalorder %s14, 3
      %p191 = pnand %p189, %p190
      %p192 = pneg %p191
      // Predicated region
      $region37: #{conv_patching_rgb2_forward.3} parent=5 // pred_check
        _
      $region38: #{conv_patching_rgb2_forward.3} parent=5 // pred_check_branch
        %194 = sbr.rel (%p191) target = $region40
      $region39: #{conv_patching_rgb2_forward.3} parent=5 // pred_region
        %s195 = ssub.s32 %s14, 1
        %p196 = scmp.lt.s32.totalorder %s19, 1
        %s197 = scalar_select %p196, %s19, 1
        %s198 = smul.addr %s197, 16
        %s199 = smul.addr %s198, 4
        %s200 = scalar_lea.vmem %s0, %s199
        %p201 = pneg %p40
        %p202 = pneg %p37
        %p203 = pneg %p61
        %p204 = pneg %p58
        %p205 = pneg %p82
        %p206 = pneg %p79
        %p207 = pneg %p103
        %p208 = pneg %p100
        %p209 = pneg %p124
        %p210 = pneg %p121
        %p211 = pneg %p150
        %p212 = pneg %p147
        %s213 = sand.u32 %s137, 1
        %s214 = scalar_lea.sflag [#allocation3], %s213
        %s215 = sand.u32 %s137, 1
        %s216 = smul.addr %s215, 384
        %s217 = scalar_lea.vmem [#allocation2], %s216
        %p218 = scmp.lt.s32.totalorder %s19, 1
        %s219 = scalar_select %p218, %s19, 1
        %s220 = smul.addr %s219, 16
        %s221 = smul.addr %s220, 4
        %s222 = scalar_lea.vmem %s0, %s221
        %v224 = vld [vmem:[%s222] sm:$0xff]
        %v225 = vld [vmem:[%s222 + $0x8] sm:$0xff]
        %v226 = vld [vmem:[%s222 + $0x10] sm:$0xff]
        %v227 = vld [vmem:[%s222 + $0x18] sm:$0xff]
        %v228 = vld [vmem:[%s222 + $0x20] sm:$0xff]
        %v229 = vld [vmem:[%s222 + $0x28] sm:$0xff]
        %v230 = vld [vmem:[%s222 + $0x30] sm:$0xff]
        %v231 = vld [vmem:[%s222 + $0x38] sm:$0xff]
        %v232 = vld [vmem:[%s1] sm:$0xff]
        %v233 = vld [vmem:[%s1 + $0x8] sm:$0xff]
        %v234 = vld [vmem:[%s1 + $0x10] sm:$0xff]
        %v235 = vld [vmem:[%s1 + $0x18] sm:$0xff]
        %v236 = vld [vmem:[%s1 + $0x20] sm:$0xff]
        %v237 = vld [vmem:[%s1 + $0x28] sm:$0xff]
        %v238 = vld [vmem:[%s1 + $0x30] sm:$0xff]
        %v239 = vld [vmem:[%s1 + $0x38] sm:$0xff]
        %v240 = vld [vmem:[%s1 + $0x40] sm:$0xff]
        %v241 = vld [vmem:[%s1 + $0x48] sm:$0xff]
        %v242 = vld [vmem:[%s1 + $0x50] sm:$0xff]
        %v243 = vld [vmem:[%s1 + $0x58] sm:$0xff]
        %v244 = vld [vmem:[%s1 + $0x60] sm:$0xff]
        %v245 = vld [vmem:[%s1 + $0x68] sm:$0xff]
        %v246 = vld [vmem:[%s1 + $0x70] sm:$0xff]
        %v247 = vld [vmem:[%s1 + $0x78] sm:$0xff]
        %v248 = vld [vmem:[%s1 + $0x80] sm:$0xff]
        %v249 = vld [vmem:[%s1 + $0x88] sm:$0xff]
        %v250 = vld [vmem:[%s1 + $0x90] sm:$0xff]
        %v251 = vld [vmem:[%s1 + $0x98] sm:$0xff]
        %v252 = vld [vmem:[%s1 + $0xa0] sm:$0xff]
        %v253 = vld [vmem:[%s1 + $0xa8] sm:$0xff]
        %v254 = vld [vmem:[%s1 + $0xb0] sm:$0xff]
        %v255 = vld [vmem:[%s1 + $0xb8] sm:$0xff]
        %v256 = vld [vmem:[%s1 + $0xc0] sm:$0xff]
        %v257 = vld [vmem:[%s1 + $0xc8] sm:$0xff]
        %v258 = vld [vmem:[%s1 + $0xd0] sm:$0xff]
        %v259 = vld [vmem:[%s1 + $0xd8] sm:$0xff]
        %v260 = vld [vmem:[%s1 + $0xe0] sm:$0xff]
        %v261 = vld [vmem:[%s1 + $0xe8] sm:$0xff]
        %v262 = vld [vmem:[%s1 + $0xf0] sm:$0xff]
        %v263 = vld [vmem:[%s1 + $0xf8] sm:$0xff]
        %v264 = vld [vmem:[%s1 + $0x100] sm:$0xff]
        %v265 = vld [vmem:[%s1 + $0x108] sm:$0xff]
        %v266 = vld [vmem:[%s1 + $0x110] sm:$0xff]
        %v267 = vld [vmem:[%s1 + $0x118] sm:$0xff]
        %v268 = vld [vmem:[%s1 + $0x120] sm:$0xff]
        %v269 = vld [vmem:[%s1 + $0x128] sm:$0xff]
        %v270 = vld [vmem:[%s1 + $0x130] sm:$0xff]
        %v271 = vld [vmem:[%s1 + $0x138] sm:$0xff]
        %v272 = vld [vmem:[%s1 + $0x140] sm:$0xff]
        %v273 = vld [vmem:[%s1 + $0x148] sm:$0xff]
        %v274 = vld [vmem:[%s1 + $0x150] sm:$0xff]
        %v275 = vld [vmem:[%s1 + $0x158] sm:$0xff]
        %v276 = vld [vmem:[%s1 + $0x160] sm:$0xff]
        %v277 = vld [vmem:[%s1 + $0x168] sm:$0xff]
        %v278 = vld [vmem:[%s1 + $0x170] sm:$0xff]
        %v279 = vld [vmem:[%s1 + $0x178] sm:$0xff]
        %v280 = vld [vmem:[%s1 + $0x180] sm:$0xff]
        %v281 = vld [vmem:[%s1 + $0x188] sm:$0xff]
        %v282 = vld [vmem:[%s1 + $0x190] sm:$0xff]
        %v283 = vld [vmem:[%s1 + $0x198] sm:$0xff]
        %v284 = vld [vmem:[%s1 + $0x1a0] sm:$0xff]
        %v285 = vld [vmem:[%s1 + $0x1a8] sm:$0xff]
        %v286 = vld [vmem:[%s1 + $0x1b0] sm:$0xff]
        %v287 = vld [vmem:[%s1 + $0x1b8] sm:$0xff]
        %v288 = vld [vmem:[%s1 + $0x1c0] sm:$0xff]
        %v289 = vld [vmem:[%s1 + $0x1c8] sm:$0xff]
        %v290 = vld [vmem:[%s1 + $0x1d0] sm:$0xff]
        %v291 = vld [vmem:[%s1 + $0x1d8] sm:$0xff]
        %v292 = vld [vmem:[%s1 + $0x1e0] sm:$0xff]
        %v293 = vld [vmem:[%s1 + $0x1e8] sm:$0xff]
        %v294 = vld [vmem:[%s1 + $0x1f0] sm:$0xff]
        %v295 = vld [vmem:[%s1 + $0x1f8] sm:$0xff]
        %v296 = vld [vmem:[%s1 + $0x200] sm:$0xff]
        %v297 = vld [vmem:[%s1 + $0x208] sm:$0xff]
        %v298 = vld [vmem:[%s1 + $0x210] sm:$0xff]
        %v299 = vld [vmem:[%s1 + $0x218] sm:$0xff]
        %v300 = vld [vmem:[%s1 + $0x220] sm:$0xff]
        %v301 = vld [vmem:[%s1 + $0x228] sm:$0xff]
        %v302 = vld [vmem:[%s1 + $0x230] sm:$0xff]
        %v303 = vld [vmem:[%s1 + $0x238] sm:$0xff]
        %v312 = vunpack.c.l.b16 %v224
        %v313 = vunpack.c.h.b16 %v224
        %v314 = vunpack.c.l.b16 %v225
        %v315 = vunpack.c.h.b16 %v225
        %v316 = vunpack.c.l.b16 %v226
        %v317 = vunpack.c.h.b16 %v226
        %v318 = vunpack.c.l.b16 %v227
        %v319 = vunpack.c.h.b16 %v227
        %v320 = vunpack.c.l.b16 %v228
        %v321 = vunpack.c.h.b16 %v228
        %v322 = vunpack.c.l.b16 %v229
        %v323 = vunpack.c.h.b16 %v229
        %v324 = vunpack.c.l.b16 %v230
        %v325 = vunpack.c.h.b16 %v230
        %v326 = vunpack.c.l.b16 %v231
        %v327 = vunpack.c.h.b16 %v231
        %v328 = vpack.c.b16 %v314, %v312
        %v329 = vpack.c.b16 %v315, %v313
        %v330 = vpack.c.b16 %v318, %v316
        %v331 = vpack.c.b16 %v319, %v317
        %v332 = vpack.c.b16 %v322, %v320
        %v333 = vpack.c.b16 %v323, %v321
        %v334 = vpack.c.b16 %v326, %v324
        %v335 = vpack.c.b16 %v327, %v325
        %v412 = vunpack.c.l.b16 %v232
        %v413 = vunpack.c.h.b16 %v232
        %v414 = vunpack.c.l.b16 %v233
        %v415 = vunpack.c.h.b16 %v233
        %v416 = vunpack.c.l.b16 %v234
        %v417 = vunpack.c.h.b16 %v234
        %v418 = vunpack.c.l.b16 %v235
        %v419 = vunpack.c.h.b16 %v235
        %v420 = vunpack.c.l.b16 %v236
        %v421 = vunpack.c.h.b16 %v236
        %v422 = vunpack.c.l.b16 %v237
        %v423 = vunpack.c.h.b16 %v237
        %v424 = vunpack.c.l.b16 %v238
        %v425 = vunpack.c.h.b16 %v238
        %v426 = vunpack.c.l.b16 %v239
        %v427 = vunpack.c.h.b16 %v239
        %v428 = vunpack.c.l.b16 %v240
        %v429 = vunpack.c.h.b16 %v240
        %v430 = vunpack.c.l.b16 %v241
        %v431 = vunpack.c.h.b16 %v241
        %v432 = vunpack.c.l.b16 %v242
        %v433 = vunpack.c.h.b16 %v242
        %v434 = vunpack.c.l.b16 %v243
        %v435 = vunpack.c.h.b16 %v243
        %v436 = vunpack.c.l.b16 %v244
        %v437 = vunpack.c.h.b16 %v244
        %v438 = vunpack.c.l.b16 %v245
        %v439 = vunpack.c.h.b16 %v245
        %v440 = vunpack.c.l.b16 %v246
        %v441 = vunpack.c.h.b16 %v246
        %v442 = vunpack.c.l.b16 %v247
        %v443 = vunpack.c.h.b16 %v247
        %v444 = vunpack.c.l.b16 %v248
        %v445 = vunpack.c.h.b16 %v248
        %v446 = vunpack.c.l.b16 %v249
        %v447 = vunpack.c.h.b16 %v249
        %v448 = vunpack.c.l.b16 %v250
        %v449 = vunpack.c.h.b16 %v250
        %v450 = vunpack.c.l.b16 %v251
        %v451 = vunpack.c.h.b16 %v251
        %v452 = vunpack.c.l.b16 %v252
        %v453 = vunpack.c.h.b16 %v252
        %v454 = vunpack.c.l.b16 %v253
        %v455 = vunpack.c.h.b16 %v253
        %v456 = vunpack.c.l.b16 %v254
        %v457 = vunpack.c.h.b16 %v254
        %v458 = vunpack.c.l.b16 %v255
        %v459 = vunpack.c.h.b16 %v255
        %v460 = vunpack.c.l.b16 %v256
        %v461 = vunpack.c.h.b16 %v256
        %v462 = vunpack.c.l.b16 %v257
        %v463 = vunpack.c.h.b16 %v257
        %v464 = vunpack.c.l.b16 %v258
        %v465 = vunpack.c.h.b16 %v258
        %v466 = vunpack.c.l.b16 %v259
        %v467 = vunpack.c.h.b16 %v259
        %v468 = vunpack.c.l.b16 %v260
        %v469 = vunpack.c.h.b16 %v260
        %v470 = vunpack.c.l.b16 %v261
        %v471 = vunpack.c.h.b16 %v261
        %v472 = vunpack.c.l.b16 %v262
        %v473 = vunpack.c.h.b16 %v262
        %v474 = vunpack.c.l.b16 %v263
        %v475 = vunpack.c.h.b16 %v263
        %v476 = vunpack.c.l.b16 %v264
        %v477 = vunpack.c.h.b16 %v264
        %v478 = vunpack.c.l.b16 %v265
        %v479 = vunpack.c.h.b16 %v265
        %v480 = vunpack.c.l.b16 %v266
        %v481 = vunpack.c.h.b16 %v266
        %v482 = vunpack.c.l.b16 %v267
        %v483 = vunpack.c.h.b16 %v267
        %v484 = vunpack.c.l.b16 %v268
        %v485 = vunpack.c.h.b16 %v268
        %v486 = vunpack.c.l.b16 %v269
        %v487 = vunpack.c.h.b16 %v269
        %v488 = vunpack.c.l.b16 %v270
        %v489 = vunpack.c.h.b16 %v270
        %v490 = vunpack.c.l.b16 %v271
        %v491 = vunpack.c.h.b16 %v271
        %v492 = vunpack.c.l.b16 %v272
        %v493 = vunpack.c.h.b16 %v272
        %v494 = vunpack.c.l.b16 %v273
        %v495 = vunpack.c.h.b16 %v273
        %v496 = vunpack.c.l.b16 %v274
        %v497 = vunpack.c.h.b16 %v274
        %v498 = vunpack.c.l.b16 %v275
        %v499 = vunpack.c.h.b16 %v275
        %v500 = vunpack.c.l.b16 %v276
        %v501 = vunpack.c.h.b16 %v276
        %v502 = vunpack.c.l.b16 %v277
        %v503 = vunpack.c.h.b16 %v277
        %v504 = vunpack.c.l.b16 %v278
        %v505 = vunpack.c.h.b16 %v278
        %v506 = vunpack.c.l.b16 %v279
        %v507 = vunpack.c.h.b16 %v279
        %v508 = vunpack.c.l.b16 %v280
        %v509 = vunpack.c.h.b16 %v280
        %v510 = vunpack.c.l.b16 %v281
        %v511 = vunpack.c.h.b16 %v281
        %v512 = vunpack.c.l.b16 %v282
        %v513 = vunpack.c.h.b16 %v282
        %v514 = vunpack.c.l.b16 %v283
        %v515 = vunpack.c.h.b16 %v283
        %v516 = vunpack.c.l.b16 %v284
        %v517 = vunpack.c.h.b16 %v284
        %v518 = vunpack.c.l.b16 %v285
        %v519 = vunpack.c.h.b16 %v285
        %v520 = vunpack.c.l.b16 %v286
        %v521 = vunpack.c.h.b16 %v286
        %v522 = vunpack.c.l.b16 %v287
        %v523 = vunpack.c.h.b16 %v287
        %v524 = vunpack.c.l.b16 %v288
        %v525 = vunpack.c.h.b16 %v288
        %v526 = vunpack.c.l.b16 %v289
        %v527 = vunpack.c.h.b16 %v289
        %v528 = vunpack.c.l.b16 %v290
        %v529 = vunpack.c.h.b16 %v290
        %v530 = vunpack.c.l.b16 %v291
        %v531 = vunpack.c.h.b16 %v291
        %v532 = vunpack.c.l.b16 %v292
        %v533 = vunpack.c.h.b16 %v292
        %v534 = vunpack.c.l.b16 %v293
        %v535 = vunpack.c.h.b16 %v293
        %v536 = vunpack.c.l.b16 %v294
        %v537 = vunpack.c.h.b16 %v294
        %v538 = vunpack.c.l.b16 %v295
        %v539 = vunpack.c.h.b16 %v295
        %v540 = vunpack.c.l.b16 %v296
        %v541 = vunpack.c.h.b16 %v296
        %v542 = vunpack.c.l.b16 %v297
        %v543 = vunpack.c.h.b16 %v297
        %v544 = vunpack.c.l.b16 %v298
        %v545 = vunpack.c.h.b16 %v298
        %v546 = vunpack.c.l.b16 %v299
        %v547 = vunpack.c.h.b16 %v299
        %v548 = vunpack.c.l.b16 %v300
        %v549 = vunpack.c.h.b16 %v300
        %v550 = vunpack.c.l.b16 %v301
        %v551 = vunpack.c.h.b16 %v301
        %v552 = vunpack.c.l.b16 %v302
        %v553 = vunpack.c.h.b16 %v302
        %v554 = vunpack.c.l.b16 %v303
        %v555 = vunpack.c.h.b16 %v303
        %v556 = vpack.c.b16 %v418, %v412
        %v557 = vpack.c.b16 %v419, %v413
        %v558 = vpack.c.b16 %v420, %v414
        %v559 = vpack.c.b16 %v421, %v415
        %v560 = vpack.c.b16 %v422, %v416
        %v561 = vpack.c.b16 %v423, %v417
        %v562 = vpack.c.b16 %v430, %v424
        %v563 = vpack.c.b16 %v431, %v425
        %v564 = vpack.c.b16 %v432, %v426
        %v565 = vpack.c.b16 %v433, %v427
        %v566 = vpack.c.b16 %v434, %v428
        %v567 = vpack.c.b16 %v435, %v429
        %v568 = vpack.c.b16 %v442, %v436
        %v569 = vpack.c.b16 %v443, %v437
        %v570 = vpack.c.b16 %v444, %v438
        %v571 = vpack.c.b16 %v445, %v439
        %v572 = vpack.c.b16 %v446, %v440
        %v573 = vpack.c.b16 %v447, %v441
        %v574 = vpack.c.b16 %v454, %v448
        %v575 = vpack.c.b16 %v455, %v449
        %v576 = vpack.c.b16 %v456, %v450
        %v577 = vpack.c.b16 %v457, %v451
        %v578 = vpack.c.b16 %v458, %v452
        %v579 = vpack.c.b16 %v459, %v453
        %v580 = vpack.c.b16 %v466, %v460
        %v581 = vpack.c.b16 %v467, %v461
        %v582 = vpack.c.b16 %v468, %v462
        %v583 = vpack.c.b16 %v469, %v463
        %v584 = vpack.c.b16 %v470, %v464
        %v585 = vpack.c.b16 %v471, %v465
        %v586 = vpack.c.b16 %v478, %v472
        %v587 = vpack.c.b16 %v479, %v473
        %v588 = vpack.c.b16 %v480, %v474
        %v589 = vpack.c.b16 %v481, %v475
        %v590 = vpack.c.b16 %v482, %v476
        %v591 = vpack.c.b16 %v483, %v477
        %v592 = vpack.c.b16 %v490, %v484
        %v593 = vpack.c.b16 %v491, %v485
        %v594 = vpack.c.b16 %v492, %v486
        %v595 = vpack.c.b16 %v493, %v487
        %v596 = vpack.c.b16 %v494, %v488
        %v597 = vpack.c.b16 %v495, %v489
        %v598 = vpack.c.b16 %v502, %v496
        %v599 = vpack.c.b16 %v503, %v497
        %v600 = vpack.c.b16 %v504, %v498
        %v601 = vpack.c.b16 %v505, %v499
        %v602 = vpack.c.b16 %v506, %v500
        %v603 = vpack.c.b16 %v507, %v501
        %v604 = vpack.c.b16 %v514, %v508
        %v605 = vpack.c.b16 %v515, %v509
        %v606 = vpack.c.b16 %v516, %v510
        %v607 = vpack.c.b16 %v517, %v511
        %v608 = vpack.c.b16 %v518, %v512
        %v609 = vpack.c.b16 %v519, %v513
        %v610 = vpack.c.b16 %v526, %v520
        %v611 = vpack.c.b16 %v527, %v521
        %v612 = vpack.c.b16 %v528, %v522
        %v613 = vpack.c.b16 %v529, %v523
        %v614 = vpack.c.b16 %v530, %v524
        %v615 = vpack.c.b16 %v531, %v525
        %v616 = vpack.c.b16 %v538, %v532
        %v617 = vpack.c.b16 %v539, %v533
        %v618 = vpack.c.b16 %v540, %v534
        %v619 = vpack.c.b16 %v541, %v535
        %v620 = vpack.c.b16 %v542, %v536
        %v621 = vpack.c.b16 %v543, %v537
        %v622 = vpack.c.b16 %v550, %v544
        %v623 = vpack.c.b16 %v551, %v545
        %v624 = vpack.c.b16 %v552, %v546
        %v625 = vpack.c.b16 %v553, %v547
        %v626 = vpack.c.b16 %v554, %v548
        %v627 = vpack.c.b16 %v555, %v549
        %vm700 = vcmask 523264
        %v702 = vsel %vm700, %v329, 0
        %v705 = vsel %vm700, %v331, 0
        %v708 = vsel %vm700, %v333, 0
        %v711 = vsel %vm700, %v335, 0
        %713 = vmatprep.subr.bf16.mxu0 %v599
        %714 = vmatpush1.bf16.msra.mxu0 %v598
        %715 = vmatprep.subr.bf16.mxu0 %v593
        %716 = vmatpush1.bf16.msra.mxu0 %v592
        %717 = vmatprep.subr.bf16.mxu0 %v587
        %718 = vmatpush1.bf16.msra.mxu0 %v586
        %719 = vmatprep.subr.bf16.mxu0 %v581
        %720 = vmatpush1.bf16.msra.mxu0 %v580
        %721 = vmatprep.subr.bf16.mxu0 %v575
        %722 = vmatpush1.bf16.msra.mxu0 %v574
        %723 = vmatprep.subr.bf16.mxu0 %v569
        %724 = vmatpush1.bf16.msra.mxu0 %v568
        %725 = vmatprep.subr.bf16.mxu0 %v563
        %726 = vmatpush1.bf16.msra.mxu0 %v562
        %727 = vmatprep.subr.bf16.mxu0 %v557
        %728 = vmatpush1.bf16.msra.mxu0 %v556
        %729 = vmatprep.subr.bf16.mxu0 0
        %730 = vmatpush2.bf16.msra.mxu0 0
        %731 = vmatprep.subr.bf16.mxu0 0
        %732 = vmatpush2.bf16.msra.mxu0 0
        %733 = vmatprep.subr.bf16.mxu0 0
        %734 = vmatpush2.bf16.msra.mxu0 0
        %735 = vmatprep.subr.bf16.mxu0 0
        %736 = vmatpush2.bf16.msra.mxu0 0
        %737 = vmatprep.subr.bf16.mxu0 %v623
        %738 = vmatpush2.bf16.msra.mxu0 %v622
        %739 = vmatprep.subr.bf16.mxu0 %v617
        %740 = vmatpush2.bf16.msra.mxu0 %v616
        %741 = vmatprep.subr.bf16.mxu0 %v611
        %742 = vmatpush2.bf16.msra.mxu0 %v610
        %743 = vmatprep.subr.bf16.mxu0 %v605
        %744 = vmatpush2.bf16.msra.mxu0 %v604
        %745 = vmatprep.mubr.bf16.mxu0 %v702
        %746 = vmatmul.mubr.bf16.gmra.mxu0 %v328
        %v747 = vpop.f32.mrf.mxu0
        %v748 = vadd.f32 0.0, %v747
        %v749 = vpop.f32.mrf.mxu0
        %v750 = vadd.f32 0.0, %v749
        %v751 = vpop.f32.mrf.mxu0
        %v752 = vadd.f32 0.0, %v751
        %v753 = vpop.f32.mrf.mxu0
        %v754 = vadd.f32 0.0, %v753
        %755 = vmatprep.mubr.bf16.mxu0 %v705
        %756 = vmatmul.mubr.bf16.gmra.mxu0 %v330
        %v757 = vpop.f32.mrf.mxu0
        %v758 = vadd.f32 0.0, %v757
        %v759 = vpop.f32.mrf.mxu0
        %v760 = vadd.f32 0.0, %v759
        %v761 = vpop.f32.mrf.mxu0
        %v762 = vadd.f32 0.0, %v761
        %v763 = vpop.f32.mrf.mxu0
        %v764 = vadd.f32 0.0, %v763
        %765 = vmatprep.mubr.bf16.mxu0 %v708
        %766 = vmatmul.mubr.bf16.gmra.mxu0 %v332
        %v767 = vpop.f32.mrf.mxu0
        %v768 = vadd.f32 0.0, %v767
        %v769 = vpop.f32.mrf.mxu0
        %v770 = vadd.f32 0.0, %v769
        %v771 = vpop.f32.mrf.mxu0
        %v772 = vadd.f32 0.0, %v771
        %v773 = vpop.f32.mrf.mxu0
        %v774 = vadd.f32 0.0, %v773
        %775 = vmatprep.mubr.bf16.mxu0 %v711
        %776 = vmatmul.mubr.bf16.gmra.mxu0 %v334
        %v777 = vpop.f32.mrf.mxu0
        %v778 = vadd.f32 0.0, %v777
        %v779 = vpop.f32.mrf.mxu0
        %v780 = vadd.f32 0.0, %v779
        %v781 = vpop.f32.mrf.mxu0
        %v782 = vadd.f32 0.0, %v781
        %v783 = vpop.f32.mrf.mxu0
        %v784 = vadd.f32 0.0, %v783
        %785 = vdwg.mxu0
        %786 = vmatprep.subr.bf16.mxu0 %v601
        %787 = vmatpush1.bf16.msra.mxu0 %v600
        %788 = vmatprep.subr.bf16.mxu0 %v595
        %789 = vmatpush1.bf16.msra.mxu0 %v594
        %790 = vmatprep.subr.bf16.mxu0 %v589
        %791 = vmatpush1.bf16.msra.mxu0 %v588
        %792 = vmatprep.subr.bf16.mxu0 %v583
        %793 = vmatpush1.bf16.msra.mxu0 %v582
        %794 = vmatprep.subr.bf16.mxu0 %v577
        %795 = vmatpush1.bf16.msra.mxu0 %v576
        %796 = vmatprep.subr.bf16.mxu0 %v571
        %797 = vmatpush1.bf16.msra.mxu0 %v570
        %798 = vmatprep.subr.bf16.mxu0 %v565
        %799 = vmatpush1.bf16.msra.mxu0 %v564
        %800 = vmatprep.subr.bf16.mxu0 %v559
        %801 = vmatpush1.bf16.msra.mxu0 %v558
        %802 = vmatprep.subr.bf16.mxu0 0
        %803 = vmatpush2.bf16.msra.mxu0 0
        %804 = vmatprep.subr.bf16.mxu0 0
        %805 = vmatpush2.bf16.msra.mxu0 0
        %806 = vmatprep.subr.bf16.mxu0 0
        %807 = vmatpush2.bf16.msra.mxu0 0
        %808 = vmatprep.subr.bf16.mxu0 0
        %809 = vmatpush2.bf16.msra.mxu0 0
        %810 = vmatprep.subr.bf16.mxu0 %v625
        %811 = vmatpush2.bf16.msra.mxu0 %v624
        %812 = vmatprep.subr.bf16.mxu0 %v619
        %813 = vmatpush2.bf16.msra.mxu0 %v618
        %814 = vmatprep.subr.bf16.mxu0 %v613
        %815 = vmatpush2.bf16.msra.mxu0 %v612
        %816 = vmatprep.subr.bf16.mxu0 %v607
        %817 = vmatpush2.bf16.msra.mxu0 %v606
        %818 = vmatprep.mubr.bf16.mxu0 %v702
        %819 = vmatmul.mubr.bf16.gmra.mxu0 %v328
        %v820 = vpop.f32.mrf.mxu0
        %v821 = vadd.f32 0.0, %v820
        %v822 = vpop.f32.mrf.mxu0
        %v823 = vadd.f32 0.0, %v822
        %v824 = vpop.f32.mrf.mxu0
        %v825 = vadd.f32 0.0, %v824
        %v826 = vpop.f32.mrf.mxu0
        %v827 = vadd.f32 0.0, %v826
        %828 = vmatprep.mubr.bf16.mxu0 %v705
        %829 = vmatmul.mubr.bf16.gmra.mxu0 %v330
        %v830 = vpop.f32.mrf.mxu0
        %v831 = vadd.f32 0.0, %v830
        %v832 = vpop.f32.mrf.mxu0
        %v833 = vadd.f32 0.0, %v832
        %v834 = vpop.f32.mrf.mxu0
        %v835 = vadd.f32 0.0, %v834
        %v836 = vpop.f32.mrf.mxu0
        %v837 = vadd.f32 0.0, %v836
        %838 = vmatprep.mubr.bf16.mxu0 %v708
        %839 = vmatmul.mubr.bf16.gmra.mxu0 %v332
        %v840 = vpop.f32.mrf.mxu0
        %v841 = vadd.f32 0.0, %v840
        %v842 = vpop.f32.mrf.mxu0
        %v843 = vadd.f32 0.0, %v842
        %v844 = vpop.f32.mrf.mxu0
        %v845 = vadd.f32 0.0, %v844
        %v846 = vpop.f32.mrf.mxu0
        %v847 = vadd.f32 0.0, %v846
        %848 = vmatprep.mubr.bf16.mxu0 %v711
        %849 = vmatmul.mubr.bf16.gmra.mxu0 %v334
        %v850 = vpop.f32.mrf.mxu0
        %v851 = vadd.f32 0.0, %v850
        %v852 = vpop.f32.mrf.mxu0
        %v853 = vadd.f32 0.0, %v852
        %v854 = vpop.f32.mrf.mxu0
        %v855 = vadd.f32 0.0, %v854
        %v856 = vpop.f32.mrf.mxu0
        %v857 = vadd.f32 0.0, %v856
        %858 = vdwg.mxu0
        %859 = vmatprep.subr.bf16.mxu0 %v603
        %860 = vmatpush1.bf16.msra.mxu0 %v602
        %861 = vmatprep.subr.bf16.mxu0 %v597
        %862 = vmatpush1.bf16.msra.mxu0 %v596
        %863 = vmatprep.subr.bf16.mxu0 %v591
        %864 = vmatpush1.bf16.msra.mxu0 %v590
        %865 = vmatprep.subr.bf16.mxu0 %v585
        %866 = vmatpush1.bf16.msra.mxu0 %v584
        %867 = vmatprep.subr.bf16.mxu0 %v579
        %868 = vmatpush1.bf16.msra.mxu0 %v578
        %869 = vmatprep.subr.bf16.mxu0 %v573
        %870 = vmatpush1.bf16.msra.mxu0 %v572
        %871 = vmatprep.subr.bf16.mxu0 %v567
        %872 = vmatpush1.bf16.msra.mxu0 %v566
        %873 = vmatprep.subr.bf16.mxu0 %v561
        %874 = vmatpush1.bf16.msra.mxu0 %v560
        %875 = vmatprep.subr.bf16.mxu0 0
        %876 = vmatpush2.bf16.msra.mxu0 0
        %877 = vmatprep.subr.bf16.mxu0 0
        %878 = vmatpush2.bf16.msra.mxu0 0
        %879 = vmatprep.subr.bf16.mxu0 0
        %880 = vmatpush2.bf16.msra.mxu0 0
        %881 = vmatprep.subr.bf16.mxu0 0
        %882 = vmatpush2.bf16.msra.mxu0 0
        %883 = vmatprep.subr.bf16.mxu0 %v627
        %884 = vmatpush2.bf16.msra.mxu0 %v626
        %885 = vmatprep.subr.bf16.mxu0 %v621
        %886 = vmatpush2.bf16.msra.mxu0 %v620
        %887 = vmatprep.subr.bf16.mxu0 %v615
        %888 = vmatpush2.bf16.msra.mxu0 %v614
        %889 = vmatprep.subr.bf16.mxu0 %v609
        %890 = vmatpush2.bf16.msra.mxu0 %v608
        %891 = vmatprep.mubr.bf16.mxu0 %v702
        %892 = vmatmul.mubr.bf16.gmra.mxu0 %v328
        %v893 = vpop.f32.mrf.mxu0
        %v894 = vadd.f32 0.0, %v893
        %v895 = vpop.f32.mrf.mxu0
        %v896 = vadd.f32 0.0, %v895
        %v897 = vpop.f32.mrf.mxu0
        %v898 = vadd.f32 0.0, %v897
        %v899 = vpop.f32.mrf.mxu0
        %v900 = vadd.f32 0.0, %v899
        %901 = vmatprep.mubr.bf16.mxu0 %v705
        %902 = vmatmul.mubr.bf16.gmra.mxu0 %v330
        %v903 = vpop.f32.mrf.mxu0
        %v904 = vadd.f32 0.0, %v903
        %v905 = vpop.f32.mrf.mxu0
        %v906 = vadd.f32 0.0, %v905
        %v907 = vpop.f32.mrf.mxu0
        %v908 = vadd.f32 0.0, %v907
        %v909 = vpop.f32.mrf.mxu0
        %v910 = vadd.f32 0.0, %v909
        %911 = vmatprep.mubr.bf16.mxu0 %v708
        %912 = vmatmul.mubr.bf16.gmra.mxu0 %v332
        %v913 = vpop.f32.mrf.mxu0
        %v914 = vadd.f32 0.0, %v913
        %v915 = vpop.f32.mrf.mxu0
        %v916 = vadd.f32 0.0, %v915
        %v917 = vpop.f32.mrf.mxu0
        %v918 = vadd.f32 0.0, %v917
        %v919 = vpop.f32.mrf.mxu0
        %v920 = vadd.f32 0.0, %v919
        %921 = vmatprep.mubr.bf16.mxu0 %v711
        %922 = vmatmul.mubr.bf16.gmra.mxu0 %v334
        %v923 = vpop.f32.mrf.mxu0
        %v924 = vadd.f32 0.0, %v923
        %v925 = vpop.f32.mrf.mxu0
        %v926 = vadd.f32 0.0, %v925
        %v927 = vpop.f32.mrf.mxu0
        %v928 = vadd.f32 0.0, %v927
        %v929 = vpop.f32.mrf.mxu0
        %v930 = vadd.f32 0.0, %v929
        %931 = vdwg.mxu0
        %v932 = vld [vmem:[%s2] sm:$0x3f]
        %v934 = vlaneseq
        %v935 = vshrl.u32 %v934, 7
        %v936 = vsub.s32 0, %v935
        %v937 = vrot.slane %v932, %v936
        %v938 = vlaneseq
        %v939 = vshrl.u32 %v938, 7
        %v940 = vsub.s32 1, %v939
        %v941 = vrot.slane %v932, %v940
        %v942 = vlaneseq
        %v943 = vshrl.u32 %v942, 7
        %v944 = vsub.s32 2, %v943
        %v945 = vrot.slane %v932, %v944
        %v946 = vlaneseq
        %v947 = vshrl.u32 %v946, 7
        %v948 = vsub.s32 3, %v947
        %v949 = vrot.slane %v932, %v948
        %v950 = vlaneseq
        %v951 = vshrl.u32 %v950, 7
        %v952 = vsub.s32 4, %v951
        %v953 = vrot.slane %v932, %v952
        %v954 = vlaneseq
        %v955 = vshrl.u32 %v954, 7
        %v956 = vsub.s32 5, %v955
        %v957 = vrot.slane %v932, %v956
        %v964 = vmul.f32 %v748, %v937
        %v965 = vmul.f32 %v750, %v941
        %v966 = vmul.f32 %v821, %v945
        %v967 = vmul.f32 %v823, %v949
        %v968 = vmul.f32 %v894, %v953
        %v969 = vmul.f32 %v896, %v957
        %v970 = vmul.f32 %v752, %v937
        %v971 = vmul.f32 %v754, %v941
        %v972 = vmul.f32 %v825, %v945
        %v973 = vmul.f32 %v827, %v949
        %v974 = vmul.f32 %v898, %v953
        %v975 = vmul.f32 %v900, %v957
        %v976 = vmul.f32 %v758, %v937
        %v977 = vmul.f32 %v760, %v941
        %v978 = vmul.f32 %v831, %v945
        %v979 = vmul.f32 %v833, %v949
        %v980 = vmul.f32 %v904, %v953
        %v981 = vmul.f32 %v906, %v957
        %v982 = vmul.f32 %v762, %v937
        %v983 = vmul.f32 %v764, %v941
        %v984 = vmul.f32 %v835, %v945
        %v985 = vmul.f32 %v837, %v949
        %v986 = vmul.f32 %v908, %v953
        %v987 = vmul.f32 %v910, %v957
        %v988 = vmul.f32 %v768, %v937
        %v989 = vmul.f32 %v770, %v941
        %v990 = vmul.f32 %v841, %v945
        %v991 = vmul.f32 %v843, %v949
        %v992 = vmul.f32 %v914, %v953
        %v993 = vmul.f32 %v916, %v957
        %v994 = vmul.f32 %v772, %v937
        %v995 = vmul.f32 %v774, %v941
        %v996 = vmul.f32 %v845, %v945
        %v997 = vmul.f32 %v847, %v949
        %v998 = vmul.f32 %v918, %v953
        %v999 = vmul.f32 %v920, %v957
        %v1000 = vmul.f32 %v778, %v937
        %v1001 = vmul.f32 %v780, %v941
        %v1002 = vmul.f32 %v851, %v945
        %v1003 = vmul.f32 %v853, %v949
        %v1004 = vmul.f32 %v924, %v953
        %v1005 = vmul.f32 %v926, %v957
        %v1006 = vmul.f32 %v782, %v937
        %v1007 = vmul.f32 %v784, %v941
        %v1008 = vmul.f32 %v855, %v945
        %v1009 = vmul.f32 %v857, %v949
        %v1010 = vmul.f32 %v928, %v953
        %v1011 = vmul.f32 %v930, %v957
        %v1012 = vld [vmem:[%s3] sm:$0x3f]
        %v1014 = vlaneseq
        %v1015 = vshrl.u32 %v1014, 7
        %v1016 = vsub.s32 0, %v1015
        %v1017 = vrot.slane %v1012, %v1016
        %v1018 = vlaneseq
        %v1019 = vshrl.u32 %v1018, 7
        %v1020 = vsub.s32 1, %v1019
        %v1021 = vrot.slane %v1012, %v1020
        %v1022 = vlaneseq
        %v1023 = vshrl.u32 %v1022, 7
        %v1024 = vsub.s32 2, %v1023
        %v1025 = vrot.slane %v1012, %v1024
        %v1026 = vlaneseq
        %v1027 = vshrl.u32 %v1026, 7
        %v1028 = vsub.s32 3, %v1027
        %v1029 = vrot.slane %v1012, %v1028
        %v1030 = vlaneseq
        %v1031 = vshrl.u32 %v1030, 7
        %v1032 = vsub.s32 4, %v1031
        %v1033 = vrot.slane %v1012, %v1032
        %v1034 = vlaneseq
        %v1035 = vshrl.u32 %v1034, 7
        %v1036 = vsub.s32 5, %v1035
        %v1037 = vrot.slane %v1012, %v1036
        %v1044 = vadd.f32 %v964, %v1017
        %v1045 = vadd.f32 %v965, %v1021
        %v1046 = vadd.f32 %v966, %v1025
        %v1047 = vadd.f32 %v967, %v1029
        %v1048 = vadd.f32 %v968, %v1033
        %v1049 = vadd.f32 %v969, %v1037
        %v1050 = vadd.f32 %v970, %v1017
        %v1051 = vadd.f32 %v971, %v1021
        %v1052 = vadd.f32 %v972, %v1025
        %v1053 = vadd.f32 %v973, %v1029
        %v1054 = vadd.f32 %v974, %v1033
        %v1055 = vadd.f32 %v975, %v1037
        %v1056 = vadd.f32 %v976, %v1017
        %v1057 = vadd.f32 %v977, %v1021
        %v1058 = vadd.f32 %v978, %v1025
        %v1059 = vadd.f32 %v979, %v1029
        %v1060 = vadd.f32 %v980, %v1033
        %v1061 = vadd.f32 %v981, %v1037
        %v1062 = vadd.f32 %v982, %v1017
        %v1063 = vadd.f32 %v983, %v1021
        %v1064 = vadd.f32 %v984, %v1025
        %v1065 = vadd.f32 %v985, %v1029
        %v1066 = vadd.f32 %v986, %v1033
        %v1067 = vadd.f32 %v987, %v1037
        %v1068 = vadd.f32 %v988, %v1017
        %v1069 = vadd.f32 %v989, %v1021
        %v1070 = vadd.f32 %v990, %v1025
        %v1071 = vadd.f32 %v991, %v1029
        %v1072 = vadd.f32 %v992, %v1033
        %v1073 = vadd.f32 %v993, %v1037
        %v1074 = vadd.f32 %v994, %v1017
        %v1075 = vadd.f32 %v995, %v1021
        %v1076 = vadd.f32 %v996, %v1025
        %v1077 = vadd.f32 %v997, %v1029
        %v1078 = vadd.f32 %v998, %v1033
        %v1079 = vadd.f32 %v999, %v1037
        %v1080 = vadd.f32 %v1000, %v1017
        %v1081 = vadd.f32 %v1001, %v1021
        %v1082 = vadd.f32 %v1002, %v1025
        %v1083 = vadd.f32 %v1003, %v1029
        %v1084 = vadd.f32 %v1004, %v1033
        %v1085 = vadd.f32 %v1005, %v1037
        %v1086 = vadd.f32 %v1006, %v1017
        %v1087 = vadd.f32 %v1007, %v1021
        %v1088 = vadd.f32 %v1008, %v1025
        %v1089 = vadd.f32 %v1009, %v1029
        %v1090 = vadd.f32 %v1010, %v1033
        %v1091 = vadd.f32 %v1011, %v1037
        %v1092 = vmax.f32 %v1044, 0.0
        %v1093 = vmax.f32 %v1045, 0.0
        %v1094 = vmax.f32 %v1046, 0.0
        %v1095 = vmax.f32 %v1047, 0.0
        %v1096 = vmax.f32 %v1048, 0.0
        %v1097 = vmax.f32 %v1049, 0.0
        %v1098 = vmax.f32 %v1050, 0.0
        %v1099 = vmax.f32 %v1051, 0.0
        %v1100 = vmax.f32 %v1052, 0.0
        %v1101 = vmax.f32 %v1053, 0.0
        %v1102 = vmax.f32 %v1054, 0.0
        %v1103 = vmax.f32 %v1055, 0.0
        %v1104 = vmax.f32 %v1056, 0.0
        %v1105 = vmax.f32 %v1057, 0.0
        %v1106 = vmax.f32 %v1058, 0.0
        %v1107 = vmax.f32 %v1059, 0.0
        %v1108 = vmax.f32 %v1060, 0.0
        %v1109 = vmax.f32 %v1061, 0.0
        %v1110 = vmax.f32 %v1062, 0.0
        %v1111 = vmax.f32 %v1063, 0.0
        %v1112 = vmax.f32 %v1064, 0.0
        %v1113 = vmax.f32 %v1065, 0.0
        %v1114 = vmax.f32 %v1066, 0.0
        %v1115 = vmax.f32 %v1067, 0.0
        %v1116 = vmax.f32 %v1068, 0.0
        %v1117 = vmax.f32 %v1069, 0.0
        %v1118 = vmax.f32 %v1070, 0.0
        %v1119 = vmax.f32 %v1071, 0.0
        %v1120 = vmax.f32 %v1072, 0.0
        %v1121 = vmax.f32 %v1073, 0.0
        %v1122 = vmax.f32 %v1074, 0.0
        %v1123 = vmax.f32 %v1075, 0.0
        %v1124 = vmax.f32 %v1076, 0.0
        %v1125 = vmax.f32 %v1077, 0.0
        %v1126 = vmax.f32 %v1078, 0.0
        %v1127 = vmax.f32 %v1079, 0.0
        %v1128 = vmax.f32 %v1080, 0.0
        %v1129 = vmax.f32 %v1081, 0.0
        %v1130 = vmax.f32 %v1082, 0.0
        %v1131 = vmax.f32 %v1083, 0.0
        %v1132 = vmax.f32 %v1084, 0.0
        %v1133 = vmax.f32 %v1085, 0.0
        %v1134 = vmax.f32 %v1086, 0.0
        %v1135 = vmax.f32 %v1087, 0.0
        %v1136 = vmax.f32 %v1088, 0.0
        %v1137 = vmax.f32 %v1089, 0.0
        %v1138 = vmax.f32 %v1090, 0.0
        %v1139 = vmax.f32 %v1091, 0.0
        %v1140 = vld [vmem:[%s4] sm:$0xff]
        %v1141 = vld [vmem:[%s4 + $0x8] sm:$0xff]
        %v1142 = vld [vmem:[%s4 + $0x10] sm:$0xff]
        %v1143 = vld [vmem:[%s4 + $0x18] sm:$0xff]
        %v1144 = vld [vmem:[%s4 + $0x20] sm:$0xff]
        %v1145 = vld [vmem:[%s4 + $0x28] sm:$0xff]
        %v1146 = vld [vmem:[%s4 + $0x30] sm:$0xff]
        %v1147 = vld [vmem:[%s4 + $0x38] sm:$0xff]
        %v1148 = vld [vmem:[%s4 + $0x40] sm:$0xff]
        %v1149 = vld [vmem:[%s4 + $0x48] sm:$0xff]
        %v1150 = vld [vmem:[%s4 + $0x50] sm:$0xff]
        %v1151 = vld [vmem:[%s4 + $0x58] sm:$0xff]
        %v1152 = vld [vmem:[%s4 + $0x60] sm:$0xff]
        %v1153 = vld [vmem:[%s4 + $0x68] sm:$0xff]
        %v1154 = vld [vmem:[%s4 + $0x70] sm:$0xff]
        %v1155 = vld [vmem:[%s4 + $0x78] sm:$0xff]
        %v1156 = vld [vmem:[%s4 + $0x80] sm:$0xff]
        %v1157 = vld [vmem:[%s4 + $0x88] sm:$0xff]
        %v1158 = vld [vmem:[%s4 + $0x90] sm:$0xff]
        %v1159 = vld [vmem:[%s4 + $0x98] sm:$0xff]
        %v1160 = vld [vmem:[%s4 + $0xa0] sm:$0xff]
        %v1161 = vld [vmem:[%s4 + $0xa8] sm:$0xff]
        %v1162 = vld [vmem:[%s4 + $0xb0] sm:$0xff]
        %v1163 = vld [vmem:[%s4 + $0xb8] sm:$0xff]
        %v1164 = vld [vmem:[%s4 + $0xc0] sm:$0xff]
        %v1165 = vld [vmem:[%s4 + $0xc8] sm:$0xff]
        %v1166 = vld [vmem:[%s4 + $0xd0] sm:$0xff]
        %v1167 = vld [vmem:[%s4 + $0xd8] sm:$0xff]
        %v1168 = vld [vmem:[%s4 + $0xe0] sm:$0xff]
        %v1169 = vld [vmem:[%s4 + $0xe8] sm:$0xff]
        %v1170 = vld [vmem:[%s4 + $0xf0] sm:$0xff]
        %v1171 = vld [vmem:[%s4 + $0xf8] sm:$0xff]
        %v1172 = vld [vmem:[%s4 + $0x100] sm:$0xff]
        %v1173 = vld [vmem:[%s4 + $0x108] sm:$0xff]
        %v1174 = vld [vmem:[%s4 + $0x110] sm:$0xff]
        %v1175 = vld [vmem:[%s4 + $0x118] sm:$0xff]
        %v1176 = vld [vmem:[%s4 + $0x120] sm:$0xff]
        %v1177 = vld [vmem:[%s4 + $0x128] sm:$0xff]
        %v1178 = vld [vmem:[%s4 + $0x130] sm:$0xff]
        %v1179 = vld [vmem:[%s4 + $0x138] sm:$0xff]
        %v1180 = vld [vmem:[%s4 + $0x140] sm:$0xff]
        %v1181 = vld [vmem:[%s4 + $0x148] sm:$0xff]
        %v1182 = vld [vmem:[%s4 + $0x150] sm:$0xff]
        %v1183 = vld [vmem:[%s4 + $0x158] sm:$0xff]
        %v1184 = vld [vmem:[%s4 + $0x160] sm:$0xff]
        %v1185 = vld [vmem:[%s4 + $0x168] sm:$0xff]
        %v1186 = vld [vmem:[%s4 + $0x170] sm:$0xff]
        %v1187 = vld [vmem:[%s4 + $0x178] sm:$0xff]
        %v1188 = vadd.f32 %v1092, %v1140
        %v1189 = vadd.f32 %v1093, %v1141
        %v1190 = vadd.f32 %v1094, %v1142
        %v1191 = vadd.f32 %v1095, %v1143
        %v1192 = vadd.f32 %v1096, %v1144
        %v1193 = vadd.f32 %v1097, %v1145
        %v1194 = vadd.f32 %v1098, %v1146
        %v1195 = vadd.f32 %v1099, %v1147
        %v1196 = vadd.f32 %v1100, %v1148
        %v1197 = vadd.f32 %v1101, %v1149
        %v1198 = vadd.f32 %v1102, %v1150
        %v1199 = vadd.f32 %v1103, %v1151
        %v1200 = vadd.f32 %v1104, %v1152
        %v1201 = vadd.f32 %v1105, %v1153
        %v1202 = vadd.f32 %v1106, %v1154
        %v1203 = vadd.f32 %v1107, %v1155
        %v1204 = vadd.f32 %v1108, %v1156
        %v1205 = vadd.f32 %v1109, %v1157
        %v1206 = vadd.f32 %v1110, %v1158
        %v1207 = vadd.f32 %v1111, %v1159
        %v1208 = vadd.f32 %v1112, %v1160
        %v1209 = vadd.f32 %v1113, %v1161
        %v1210 = vadd.f32 %v1114, %v1162
        %v1211 = vadd.f32 %v1115, %v1163
        %v1212 = vadd.f32 %v1116, %v1164
        %v1213 = vadd.f32 %v1117, %v1165
        %v1214 = vadd.f32 %v1118, %v1166
        %v1215 = vadd.f32 %v1119, %v1167
        %v1216 = vadd.f32 %v1120, %v1168
        %v1217 = vadd.f32 %v1121, %v1169
        %v1218 = vadd.f32 %v1122, %v1170
        %v1219 = vadd.f32 %v1123, %v1171
        %v1220 = vadd.f32 %v1124, %v1172
        %v1221 = vadd.f32 %v1125, %v1173
        %v1222 = vadd.f32 %v1126, %v1174
        %v1223 = vadd.f32 %v1127, %v1175
        %v1224 = vadd.f32 %v1128, %v1176
        %v1225 = vadd.f32 %v1129, %v1177
        %v1226 = vadd.f32 %v1130, %v1178
        %v1227 = vadd.f32 %v1131, %v1179
        %v1228 = vadd.f32 %v1132, %v1180
        %v1229 = vadd.f32 %v1133, %v1181
        %v1230 = vadd.f32 %v1134, %v1182
        %v1231 = vadd.f32 %v1135, %v1183
        %v1232 = vadd.f32 %v1136, %v1184
        %v1233 = vadd.f32 %v1137, %v1185
        %v1234 = vadd.f32 %v1138, %v1186
        %v1235 = vadd.f32 %v1139, %v1187
        %1236 = vst [vmem:[%s217] sm:$0xff] %v1188
        %1237 = vst [vmem:[%s217 + $0x8] sm:$0xff] %v1189
        %1238 = vst [vmem:[%s217 + $0x10] sm:$0xff] %v1190
        %1239 = vst [vmem:[%s217 + $0x18] sm:$0xff] %v1191
        %1240 = vst [vmem:[%s217 + $0x20] sm:$0xff] %v1192
        %1241 = vst [vmem:[%s217 + $0x28] sm:$0xff] %v1193
        %1242 = vst [vmem:[%s217 + $0x30] sm:$0xff] %v1194
        %1243 = vst [vmem:[%s217 + $0x38] sm:$0xff] %v1195
        %1244 = vst [vmem:[%s217 + $0x40] sm:$0xff] %v1196
        %1245 = vst [vmem:[%s217 + $0x48] sm:$0xff] %v1197
        %1246 = vst [vmem:[%s217 + $0x50] sm:$0xff] %v1198
        %1247 = vst [vmem:[%s217 + $0x58] sm:$0xff] %v1199
        %1248 = vst [vmem:[%s217 + $0x60] sm:$0xff] %v1200
        %1249 = vst [vmem:[%s217 + $0x68] sm:$0xff] %v1201
        %1250 = vst [vmem:[%s217 + $0x70] sm:$0xff] %v1202
        %1251 = vst [vmem:[%s217 + $0x78] sm:$0xff] %v1203
        %1252 = vst [vmem:[%s217 + $0x80] sm:$0xff] %v1204
        %1253 = vst [vmem:[%s217 + $0x88] sm:$0xff] %v1205
        %1254 = vst [vmem:[%s217 + $0x90] sm:$0xff] %v1206
        %1255 = vst [vmem:[%s217 + $0x98] sm:$0xff] %v1207
        %1256 = vst [vmem:[%s217 + $0xa0] sm:$0xff] %v1208
        %1257 = vst [vmem:[%s217 + $0xa8] sm:$0xff] %v1209
        %1258 = vst [vmem:[%s217 + $0xb0] sm:$0xff] %v1210
        %1259 = vst [vmem:[%s217 + $0xb8] sm:$0xff] %v1211
        %1260 = vst [vmem:[%s217 + $0xc0] sm:$0xff] %v1212
        %1261 = vst [vmem:[%s217 + $0xc8] sm:$0xff] %v1213
        %1262 = vst [vmem:[%s217 + $0xd0] sm:$0xff] %v1214
        %1263 = vst [vmem:[%s217 + $0xd8] sm:$0xff] %v1215
        %1264 = vst [vmem:[%s217 + $0xe0] sm:$0xff] %v1216
        %1265 = vst [vmem:[%s217 + $0xe8] sm:$0xff] %v1217
        %1266 = vst [vmem:[%s217 + $0xf0] sm:$0xff] %v1218
        %1267 = vst [vmem:[%s217 + $0xf8] sm:$0xff] %v1219
        %1268 = vst [vmem:[%s217 + $0x100] sm:$0xff] %v1220
        %1269 = vst [vmem:[%s217 + $0x108] sm:$0xff] %v1221
        %1270 = vst [vmem:[%s217 + $0x110] sm:$0xff] %v1222
        %1271 = vst [vmem:[%s217 + $0x118] sm:$0xff] %v1223
        %1272 = vst [vmem:[%s217 + $0x120] sm:$0xff] %v1224
        %1273 = vst [vmem:[%s217 + $0x128] sm:$0xff] %v1225
        %1274 = vst [vmem:[%s217 + $0x130] sm:$0xff] %v1226
        %1275 = vst [vmem:[%s217 + $0x138] sm:$0xff] %v1227
        %1276 = vst [vmem:[%s217 + $0x140] sm:$0xff] %v1228
        %1277 = vst [vmem:[%s217 + $0x148] sm:$0xff] %v1229
        %1278 = vst [vmem:[%s217 + $0x150] sm:$0xff] %v1230
        %1279 = vst [vmem:[%s217 + $0x158] sm:$0xff] %v1231
        %1280 = vst [vmem:[%s217 + $0x160] sm:$0xff] %v1232
        %1281 = vst [vmem:[%s217 + $0x168] sm:$0xff] %v1233
        %1282 = vst [vmem:[%s217 + $0x170] sm:$0xff] %v1234
        %1283 = vst [vmem:[%s217 + $0x178] sm:$0xff] %v1235
        %s1284 = sand.u32 %s137, 1
        %s1285 = scalar_lea.sflag [#allocation3], %s1284
        %s1286 = sand.u32 %s137, 1
        %s1287 = smul.addr %s1286, 384
        %s1288 = scalar_lea.vmem [#allocation2], %s1287
        // Predicated region
        $region41: #{conv_patching_rgb2_forward.3} parent=39 // pred_check
          %p1289 = pneg %p147
        $region42: #{conv_patching_rgb2_forward.3} parent=39 // pred_check_branch
          %1291 = sbr.rel (%p1289) target = $region44
        $region43: #{conv_patching_rgb2_forward.3} parent=39 // pred_region
          %s1293 = ssub.s32 6144, 6144
          %1294 = vsyncadd %s1285, %s1293
          %s1295 = smul.addr %s19, 48
          %s1296 = smul.addr %s1295, 128
          %s1297 = scalar_lea.hbm %s5, %s1296
          %s1298 = sshll.u32 %s1288, 4
          %s1299 = int_to_ptr.vmem [resolvable:$true] %s1298
          %1304 = dma.vmem_to_hbm [thread:$0]  %s1299, 6144, %s1297, %s1285, 768, 768, 48
        $region44: #{conv_patching_rgb2_forward.3} parent=39 // pred_fallthru
          _
      $region40: #{conv_patching_rgb2_forward.3} parent=5 // pred_fallthru
        _
      %p1305 = scmp.le.s32.totalorder 2, %s14
      // Predicated region
      $region45: #{conv_patching_rgb2_forward.3} parent=5 // pred_check
        %p1306 = pneg %p1305
      $region46: #{conv_patching_rgb2_forward.3} parent=5 // pred_check_branch
        %1308 = sbr.rel (%p1306) target = $region48
      $region47: #{conv_patching_rgb2_forward.3} parent=5 // pred_region
        %s1309 = ssub.s32 %s14, 2
        // Predicated region
        $region49: #{conv_patching_rgb2_forward.3} parent=47 // pred_check
          %p1310 = pneg %p153
        $region50: #{conv_patching_rgb2_forward.3} parent=47 // pred_check_branch
          %1312 = sbr.rel (%p1310) target = $region52
        $region51: #{conv_patching_rgb2_forward.3} parent=47 // pred_region
          %s1313 = sand.u32 %s138, 1
          %s1314 = scalar_lea.sflag [#allocation3], %s1313
          %s1315 = sand.u32 %s138, 1
          %s1316 = smul.addr %s1315, 384
          %s1317 = scalar_lea.vmem [#allocation2], %s1316
          %1318 = dma.done %s1314, 6144
        $region52: #{conv_patching_rgb2_forward.3} parent=47 // pred_fallthru
          _
      $region48: #{conv_patching_rgb2_forward.3} parent=5 // pred_fallthru
        _
    $region6: #{conv_patching_rgb2_forward.3} parent=1 // loop_footer
      %s18 = sadd.s32 1, %s14
    $region7: #{conv_patching_rgb2_forward.3} parent=1 // loop_footer_branch
      %13 = sbr.rel target = $region3
    $region8: #{conv_patching_rgb2_forward.3} parent=1 // loop_exit
      _
    %1319 = vsyncpa [#allocation3], 1
    %s1320 = scalar_lea.sflag [#allocation3], 1
    %1321 = vsyncpa %s1320, 1

</llo_original>
